<compile_context>
chip_gen: v7x
topology: tpu7x:2x2x1
jax: 0.10.0
libtpu: 0.0.40
codegen_flags: <defaults>
</compile_context>

<pallas_src>
import jax
import jax.numpy as jnp
from jax.experimental import pallas as pl
from jax.experimental.pallas import tpu as pltpu

KERNEL_SIZE = 2   # canonical TCN kernel_size
LANE = 128        # TPU lane width
SUBLANE = 8       # f32 sublane count (activation slabs are f32)


def _round_up(n, m):
    return ((n + m - 1) // m) * m


# --------------------------- fused TCN kernel ---------------------------
def _make_fused_tcn_kernel(level_meta, seq_len, compute_dtype):
    """Kernel running all TCN levels on one (rows, C) activation slab.

    level_meta: tuple of (dilation:int, has_downsample:bool) per level (static).
    seq_len:    T (static). Rows are ordered (b0:t0..tT-1, b1:t0.., ...) and every block
                starts at a batch boundary, so the causal mask is (row % T) >= shift and
                pltpu.roll never leaks history across batch elements.
    Ref order:  x, [w1_tap0, w1_tap1, b1, w2_tap0, w2_tap1, b2, (wd, bd)] * num_levels, out.
    Weights are compute_dtype (bf16); biases / activations / accumulation are f32.
    """

    def kernel(x_ref, *refs):
        o_ref = refs[-1]
        w = refs[:-1]

        cur = x_ref[...]                                        # (M, Cin_p) f32
        m = cur.shape[0]
        # Hoist the time-index iota once (JAX does not CSE broadcast_in_dim per level).
        t_in_seq = jax.lax.broadcasted_iota(jnp.int32, (m, 1), 0) % seq_len

        idx = 0
        for dilation, has_downsample in level_meta:
            w1a, w1b, b1, w2a, w2b, b2 = w[idx:idx + 6]
            idx += 6
            keep = t_in_seq >= dilation                         # causal left-pad/chomp mask

            def conv(inp, wa_ref, wb_ref, b_ref):
                # Dilated causal conv, K=2 taps as TWO accumulated MXU dots (no concat copy):
                #   y[t] = x[t] @ W0 + x[t-d] @ W1 + b     (x[t-d] := 0 for t < d)
                shifted = jnp.where(keep,
                                    pltpu.roll(inp, dilation, axis=0),
                                    jnp.zeros_like(inp))
                y = jnp.dot(inp.astype(compute_dtype), wa_ref[...],
                            preferred_element_type=jnp.float32)
                y = y + jnp.dot(shifted.astype(compute_dtype), wb_ref[...],
                                preferred_element_type=jnp.float32)
                return y + b_ref[...]                           # bias add in f32

            h = jnp.maximum(conv(cur, w1a, w1b, b1), 0.0)       # conv1 -> chomp -> ReLU
            g = jnp.maximum(conv(h, w2a, w2b, b2), 0.0)         # conv2 -> chomp -> ReLU

            if has_downsample:                                  # 1x1 conv residual
                wd, bd = w[idx:idx + 2]
                idx += 2
                res = jnp.dot(cur.astype(compute_dtype), wd[...],
                              preferred_element_type=jnp.float32) + bd[...]
            else:                                               # identity residual: no matmul
                res = cur

            cur = jnp.maximum(g + res, 0.0)

        o_ref[...] = cur.astype(o_ref.dtype)

    return kernel


# --------------------------- weight packing ---------------------------
def _pack_matrix(w, cin_p, cout_p, dtype):
    """(Cin, Cout) -> (cin_p, cout_p), zero-padded, cast to MXU operand dtype."""
    cin, cout = w.shape
    wp = jnp.zeros((cin_p, cout_p), jnp.float32).at[:cin, :cout].set(w)
    return wp.astype(dtype)


def _pack_bias(b, cout_p):
    return jnp.zeros((1, cout_p), jnp.float32).at[:, :b.shape[-1]].set(b)


def _pick_batch_tile(batch, seq_len, target_rows):
    """Pick b_tile (a divisor of batch) so that rows = b_tile*T:
       - satisfies the sublane constraint (rows % 8 == 0, or rows == full B*T extent),
       - is as large as possible while <= target_rows (MXU M / pipelining efficiency),
       - prefers a grid length >= 2 (both v7x TensorCores busy)."""
    divisors = [c for c in range(1, batch + 1) if batch % c == 0]
    legal = [c for c in divisors
             if c == batch or (c * seq_len) % SUBLANE == 0]      # c == batch -> full extent
    fitting = [c for c in legal if c * seq_len <= target_rows]
    if fitting:
        two_core = [c for c in fitting if batch // c >= 2]
        return max(two_core) if two_core else max(fitting)
    # Nothing fits the target: take the smallest legal tile (largest grid).
    # TODO(synk): T-tiling with a causal halo would be the proper fix for very long T.
    return min(legal)


def _vmem_limit_bytes(rows, cin_p, ch_p, weight_bytes):
    io = 2 * rows * (cin_p + ch_p) * 4          # double-buffered input + output blocks
    tmp = 10 * rows * max(cin_p, ch_p) * 4      # per-level temporaries (generous)
    est = io + tmp + 2 * weight_bytes + (4 << 20)
    # Cap at 64 MiB (v7x physical VMEM per TensorCore); floor at 32 MiB.
    return int(min(max(est, 32 << 20), 64 << 20))


# --------------------------- Encoder forward ---------------------------
def encoder_forward(params, x, *, compute_dtype=jnp.bfloat16, target_rows=2048):
    """x: (B, T, input_dims) f32 -> (B, T, hidden_dims) f32 via ONE fused pallas_call."""
    B, T, cin = x.shape
    hidden = params[-1]["w1"].shape[-1]
    cin_p = _round_up(cin, LANE)
    ch_p = _round_up(hidden, LANE)

    # Pack per-level weights (zero-padded lanes keep padded output channels exactly 0, so
    # they never leak through the residual / ReLU into later levels).  Matmul operands bf16.
    flat_w = []
    level_meta = []
    lvl_cin_p = cin_p
    for p in params:
        flat_w += [
            _pack_matrix(p["w1"][0], lvl_cin_p, ch_p, compute_dtype),
            _pack_matrix(p["w1"][1], lvl_cin_p, ch_p, compute_dtype),
            _pack_bias(p["b1"], ch_p),
            _pack_matrix(p["w2"][0], ch_p, ch_p, compute_dtype),
            _pack_matrix(p["w2"][1], ch_p, ch_p, compute_dtype),
            _pack_bias(p["b2"], ch_p),
        ]
        has_ds = p["wd"] is not None
        if has_ds:
            flat_w += [_pack_matrix(p["wd"], lvl_cin_p, ch_p, compute_dtype),
                       _pack_bias(p["bd"], ch_p)]
        level_meta.append((int(p["dilation"]), has_ds))
        lvl_cin_p = ch_p

    # Lane-dense, row-flattened activations: (B, T, Cin) -> (B*T, cin_p).
    xp = jnp.zeros((B, T, cin_p), jnp.float32).at[..., :cin].set(x.astype(jnp.float32))
    xp = xp.reshape(B * T, cin_p)

    b_tile = _pick_batch_tile(B, T, target_rows)
    rows = b_tile * T                      # rows per grid step (multiple of T, batch-aligned)
    grid = (B // b_tile,)

    const2 = lambda b: (0, 0)              # weights: loaded once, VMEM-resident
    in_specs = [pl.BlockSpec((rows, cin_p), lambda b: (b, 0))]
    in_specs += [pl.BlockSpec(w.shape, const2) for w in flat_w]

    weight_bytes = sum(int(w.size) * w.dtype.itemsize for w in flat_w)
    kernel = _make_fused_tcn_kernel(tuple(level_meta), T, compute_dtype)

    out = pl.pallas_call(
        kernel,
        out_shape=jax.ShapeDtypeStruct((B * T, ch_p), jnp.float32),
        grid=grid,
        in_specs=in_specs,
        out_specs=pl.BlockSpec((rows, ch_p), lambda b: (b, 0)),
        compiler_params=pltpu.CompilerParams(
            dimension_semantics=("parallel",),
            vmem_limit_bytes=_vmem_limit_bytes(rows, cin_p, ch_p, weight_bytes)),
    )(xp, *flat_w)

    return out.reshape(B, T, ch_p)[..., :hidden]


# --------------------------- parameter init ---------------------------
def init_encoder_params(key, input_dims, hidden_dims, num_levels):
    """Deterministic synthetic init (TCN init_weights uses N(0, 0.01) for conv weights)."""
    params = []
    cin = input_dims
    for i in range(num_levels):
        cout = hidden_dims
        key, k1, k2, k3, k4, k5, k6 = jax.random.split(key, 7)
        w1 = 0.01 * jax.random.normal(k1, (KERNEL_SIZE, cin, cout), jnp.float32)
        b1 = 0.01 * jax.random.normal(k2, (1, cout), jnp.float32)
        w2 = 0.01 * jax.random.normal(k3, (KERNEL_SIZE, cout, cout), jnp.float32)
        b2 = 0.01 * jax.random.normal(k4, (1, cout), jnp.float32)
        if cin != cout:
            wd = 0.01 * jax.random.normal(k5, (cin, cout), jnp.float32)
            bd = 0.01 * jax.random.normal(k6, (1, cout), jnp.float32)
        else:
            wd, bd = None, None            # identity residual (no downsample conv)
        params.append(dict(w1=w1, b1=b1, w2=w2, b2=b2, wd=wd, bd=bd, dilation=2 ** i))
        cin = cout
    return params


# ---------------- pure-JAX reference (for correctness check) ----------------
def _ref_block(x, p, compute_dtype):
    d = p["dilation"]

    def conv(inp, w, b):
        T = inp.shape[1]
        acc = jnp.einsum("btc,co->bto", inp.astype(compute_dtype),
                         w[0].astype(compute_dtype),
                         preferred_element_type=jnp.float32)
        for k in range(1, KERNEL_SIZE):
            s = k * d
            shifted = jnp.pad(inp, ((0, 0), (s, 0), (0, 0)))[:, :T, :]
            acc = acc + jnp.einsum("btc,co->bto", shifted.astype(compute_dtype),
                                   w[k].astype(compute_dtype),
                                   preferred_element_type=jnp.float32)
        return acc + b

    h = jax.nn.relu(conv(x, p["w1"], p["b1"]))
    g = jax.nn.relu(conv(h, p["w2"], p["b2"]))
    if p["wd"] is not None:
        res = jnp.einsum("btc,co->bto", x.astype(compute_dtype),
                         p["wd"].astype(compute_dtype),
                         preferred_element_type=jnp.float32) + p["bd"]
    else:
        res = x
    return jax.nn.relu(g + res)


def encoder_forward_ref(params, x, compute_dtype=jnp.float32):
    out = x
    for p in params:
        out = _ref_block(out, p, compute_dtype)
    return out


if __name__ == "__main__":
    B, T, input_dims, hidden_dims, num_levels = 2, 16, 4, 32, 2

    key = jax.random.PRNGKey(0)
    kx, kp = jax.random.split(key)
    x = jax.random.normal(kx, (B, T, input_dims), jnp.float32)
    params = init_encoder_params(kp, input_dims, hidden_dims, num_levels)

    out = jax.block_until_ready(encoder_forward(params, x))
    ref_bf16 = jax.block_until_ready(encoder_forward_ref(params, x, jnp.bfloat16))
    ref_f32 = jax.block_until_ready(encoder_forward_ref(params, x, jnp.float32))

    assert out.shape == (B, T, hidden_dims)
    # Structural check against a bf16-operand reference (matches kernel's MXU precision).
    assert jnp.allclose(out, ref_bf16, atol=1e-3, rtol=1e-2), "mismatch vs bf16 reference"
    # Numeric sanity against the pure-f32 reference (bf16 operand rounding tolerance).
    assert jnp.allclose(out, ref_f32, atol=1e-2, rtol=1e-2), "mismatch vs f32 reference"

    print("KERNEL_OK")
</pallas_src>

<mosaic_0001>
module attributes {stable_mosaic.version = 11 : i64} {
  func.func @kernel(%arg0: i32, %arg1: memref<16x128xf32, #tpu.memory_space<vmem>>, %arg2: memref<128x128xbf16, #tpu.memory_space<vmem>>, %arg3: memref<128x128xbf16, #tpu.memory_space<vmem>>, %arg4: memref<1x128xf32, #tpu.memory_space<vmem>>, %arg5: memref<128x128xbf16, #tpu.memory_space<vmem>>, %arg6: memref<128x128xbf16, #tpu.memory_space<vmem>>, %arg7: memref<1x128xf32, #tpu.memory_space<vmem>>, %arg8: memref<128x128xbf16, #tpu.memory_space<vmem>>, %arg9: memref<1x128xf32, #tpu.memory_space<vmem>>, %arg10: memref<128x128xbf16, #tpu.memory_space<vmem>>, %arg11: memref<128x128xbf16, #tpu.memory_space<vmem>>, %arg12: memref<1x128xf32, #tpu.memory_space<vmem>>, %arg13: memref<128x128xbf16, #tpu.memory_space<vmem>>, %arg14: memref<128x128xbf16, #tpu.memory_space<vmem>>, %arg15: memref<1x128xf32, #tpu.memory_space<vmem>>, %arg16: memref<16x128xf32, #tpu.memory_space<vmem>>) attributes {dimension_semantics = [#tpu.dimension_semantics<parallel>], iteration_bounds = array<i64: 2>, scalar_prefetch = 0 : i64, scratch_operands = 0 : i64, tpu.core_type = #tpu.core_type<tc>, window_params = [{transform_indices = @transform_0, window_bounds = array<i64: 16, 128>}, {pipeline_mode = #tpu.pipeline_mode<synchronous>, transform_indices = @transform_1, window_bounds = array<i64: 128, 128>}, {pipeline_mode = #tpu.pipeline_mode<synchronous>, transform_indices = @transform_2, window_bounds = array<i64: 128, 128>}, {pipeline_mode = #tpu.pipeline_mode<synchronous>, transform_indices = @transform_3, window_bounds = array<i64: 1, 128>}, {pipeline_mode = #tpu.pipeline_mode<synchronous>, transform_indices = @transform_4, window_bounds = array<i64: 128, 128>}, {pipeline_mode = #tpu.pipeline_mode<synchronous>, transform_indices = @transform_5, window_bounds = array<i64: 128, 128>}, {pipeline_mode = #tpu.pipeline_mode<synchronous>, transform_indices = @transform_6, window_bounds = array<i64: 1, 128>}, {pipeline_mode = #tpu.pipeline_mode<synchronous>, transform_indices = @transform_7, window_bounds = array<i64: 128, 128>}, {pipeline_mode = #tpu.pipeline_mode<synchronous>, transform_indices = @transform_8, window_bounds = array<i64: 1, 128>}, {pipeline_mode = #tpu.pipeline_mode<synchronous>, transform_indices = @transform_9, window_bounds = array<i64: 128, 128>}, {pipeline_mode = #tpu.pipeline_mode<synchronous>, transform_indices = @transform_10, window_bounds = array<i64: 128, 128>}, {pipeline_mode = #tpu.pipeline_mode<synchronous>, transform_indices = @transform_11, window_bounds = array<i64: 1, 128>}, {pipeline_mode = #tpu.pipeline_mode<synchronous>, transform_indices = @transform_12, window_bounds = array<i64: 128, 128>}, {pipeline_mode = #tpu.pipeline_mode<synchronous>, transform_indices = @transform_13, window_bounds = array<i64: 128, 128>}, {pipeline_mode = #tpu.pipeline_mode<synchronous>, transform_indices = @transform_14, window_bounds = array<i64: 1, 128>}, {transform_indices = @transform_15, window_bounds = array<i64: 16, 128>}]} {
    %c0 = arith.constant 0 : index
    %c0_0 = arith.constant 0 : index
    %0 = vector.load %arg1[%c0, %c0_0] : memref<16x128xf32, #tpu.memory_space<vmem>>, vector<16x128xf32>
    %1 = tpu.iota {dimensions = array<i32: 0>} : vector<16x1xi32>
    %c16_i32 = arith.constant 16 : i32
    %c0_i32 = arith.constant 0 : i32
    %2 = arith.cmpi eq, %c16_i32, %c0_i32 : i32
    %c1_i32 = arith.constant 1 : i32
    %3 = arith.select %2, %c1_i32, %c16_i32 : i32
    %4 = vector.broadcast %3 : i32 to vector<16x1xi32>
    %5 = arith.remsi %1, %4 : vector<16x1xi32>
    %c0_i32_1 = arith.constant 0 : i32
    %6 = vector.broadcast %c0_i32_1 : i32 to vector<16x1xi32>
    %7 = arith.cmpi ne, %5, %6 : vector<16x1xi32>
    %c0_i32_2 = arith.constant 0 : i32
    %8 = vector.broadcast %c0_i32_2 : i32 to vector<16x1xi32>
    %9 = arith.cmpi slt, %5, %8 : vector<16x1xi32>
    %c0_i32_3 = arith.constant 0 : i32
    %10 = arith.cmpi slt, %3, %c0_i32_3 : i32
    %11 = vector.broadcast %10 : i1 to vector<16x1xi1>
    %12 = vector.broadcast %11 : vector<16x1xi1> to vector<16x1xi1>
    %13 = arith.xori %9, %12 : vector<16x1xi1>
    %14 = arith.andi %13, %7 : vector<16x1xi1>
    %15 = vector.broadcast %3 : i32 to vector<16x1xi32>
    %16 = arith.addi %5, %15 : vector<16x1xi32>
    %17 = arith.select %14, %16, %5 : vector<16x1xi1>, vector<16x1xi32>
    %c1_i32_4 = arith.constant 1 : i32
    %18 = vector.broadcast %c1_i32_4 : i32 to vector<16x1xi32>
    %19 = arith.cmpi sge, %17, %18 : vector<16x1xi32>
    %c1_i32_5 = arith.constant 1 : i32
    %20 = tpu.dynamic_rotate %0 by %c1_i32_5 dim 0 : vector<16x128xf32>, i32 -> vector<16x128xf32>
    %cst = arith.constant 0.000000e+00 : f32
    %21 = vector.broadcast %cst : f32 to vector<16x128xf32>
    %22 = vector.shape_cast %19 : vector<16x1xi1> to vector<16x1xi1>
    %23 = vector.broadcast %22 : vector<16x1xi1> to vector<16x128xi1>
    %24 = arith.select %23, %20, %21 : vector<16x128xi1>, vector<16x128xf32>
    %25 = arith.truncf %0 : vector<16x128xf32> to vector<16x128xbf16>
    %c0_6 = arith.constant 0 : index
    %c0_7 = arith.constant 0 : index
    %26 = vector.load %arg2[%c0_6, %c0_7] : memref<128x128xbf16, #tpu.memory_space<vmem>>, vector<128x128xbf16>
    %cst_8 = arith.constant dense<0.000000e+00> : vector<16x128xf32>
    %27 = tpu.matmul %25, %26, %cst_8 {dimension_numbers = #tpu.dot_dimension_numbers<[1], [0], [0], [1], [0, 0, 1, 1], [], []>} : vector<16x128xbf16>, vector<128x128xbf16>, vector<16x128xf32> -> vector<16x128xf32>
    %28 = arith.truncf %24 : vector<16x128xf32> to vector<16x128xbf16>
    %c0_9 = arith.constant 0 : index
    %c0_10 = arith.constant 0 : index
    %29 = vector.load %arg3[%c0_9, %c0_10] : memref<128x128xbf16, #tpu.memory_space<vmem>>, vector<128x128xbf16>
    %cst_11 = arith.constant dense<0.000000e+00> : vector<16x128xf32>
    %30 = tpu.matmul %28, %29, %cst_11 {dimension_numbers = #tpu.dot_dimension_numbers<[1], [0], [0], [1], [0, 0, 1, 1], [], []>} : vector<16x128xbf16>, vector<128x128xbf16>, vector<16x128xf32> -> vector<16x128xf32>
    %31 = arith.addf %27, %30 : vector<16x128xf32>
    %c0_12 = arith.constant 0 : index
    %c0_13 = arith.constant 0 : index
    %32 = vector.load %arg4[%c0_12, %c0_13] : memref<1x128xf32, #tpu.memory_space<vmem>>, vector<1x128xf32>
    %33 = vector.broadcast %32 : vector<1x128xf32> to vector<16x128xf32>
    %34 = arith.addf %31, %33 : vector<16x128xf32>
    %cst_14 = arith.constant 0.000000e+00 : f32
    %35 = vector.broadcast %cst_14 : f32 to vector<16x128xf32>
    %36 = arith.maximumf %34, %35 : vector<16x128xf32>
    %c1_i32_15 = arith.constant 1 : i32
    %37 = tpu.dynamic_rotate %36 by %c1_i32_15 dim 0 : vector<16x128xf32>, i32 -> vector<16x128xf32>
    %cst_16 = arith.constant 0.000000e+00 : f32
    %38 = vector.broadcast %cst_16 : f32 to vector<16x128xf32>
    %39 = vector.shape_cast %19 : vector<16x1xi1> to vector<16x1xi1>
    %40 = vector.broadcast %39 : vector<16x1xi1> to vector<16x128xi1>
    %41 = arith.select %40, %37, %38 : vector<16x128xi1>, vector<16x128xf32>
    %42 = arith.truncf %36 : vector<16x128xf32> to vector<16x128xbf16>
    %c0_17 = arith.constant 0 : index
    %c0_18 = arith.constant 0 : index
    %43 = vector.load %arg5[%c0_17, %c0_18] : memref<128x128xbf16, #tpu.memory_space<vmem>>, vector<128x128xbf16>
    %cst_19 = arith.constant dense<0.000000e+00> : vector<16x128xf32>
    %44 = tpu.matmul %42, %43, %cst_19 {dimension_numbers = #tpu.dot_dimension_numbers<[1], [0], [0], [1], [0, 0, 1, 1], [], []>} : vector<16x128xbf16>, vector<128x128xbf16>, vector<16x128xf32> -> vector<16x128xf32>
    %45 = arith.truncf %41 : vector<16x128xf32> to vector<16x128xbf16>
    %c0_20 = arith.constant 0 : index
    %c0_21 = arith.constant 0 : index
    %46 = vector.load %arg6[%c0_20, %c0_21] : memref<128x128xbf16, #tpu.memory_space<vmem>>, vector<128x128xbf16>
    %cst_22 = arith.constant dense<0.000000e+00> : vector<16x128xf32>
    %47 = tpu.matmul %45, %46, %cst_22 {dimension_numbers = #tpu.dot_dimension_numbers<[1], [0], [0], [1], [0, 0, 1, 1], [], []>} : vector<16x128xbf16>, vector<128x128xbf16>, vector<16x128xf32> -> vector<16x128xf32>
    %48 = arith.addf %44, %47 : vector<16x128xf32>
    %c0_23 = arith.constant 0 : index
    %c0_24 = arith.constant 0 : index
    %49 = vector.load %arg7[%c0_23, %c0_24] : memref<1x128xf32, #tpu.memory_space<vmem>>, vector<1x128xf32>
    %50 = vector.broadcast %49 : vector<1x128xf32> to vector<16x128xf32>
    %51 = arith.addf %48, %50 : vector<16x128xf32>
    %cst_25 = arith.constant 0.000000e+00 : f32
    %52 = vector.broadcast %cst_25 : f32 to vector<16x128xf32>
    %53 = arith.maximumf %51, %52 : vector<16x128xf32>
    %54 = arith.truncf %0 : vector<16x128xf32> to vector<16x128xbf16>
    %c0_26 = arith.constant 0 : index
    %c0_27 = arith.constant 0 : index
    %55 = vector.load %arg8[%c0_26, %c0_27] : memref<128x128xbf16, #tpu.memory_space<vmem>>, vector<128x128xbf16>
    %cst_28 = arith.constant dense<0.000000e+00> : vector<16x128xf32>
    %56 = tpu.matmul %54, %55, %cst_28 {dimension_numbers = #tpu.dot_dimension_numbers<[1], [0], [0], [1], [0, 0, 1, 1], [], []>} : vector<16x128xbf16>, vector<128x128xbf16>, vector<16x128xf32> -> vector<16x128xf32>
    %c0_29 = arith.constant 0 : index
    %c0_30 = arith.constant 0 : index
    %57 = vector.load %arg9[%c0_29, %c0_30] : memref<1x128xf32, #tpu.memory_space<vmem>>, vector<1x128xf32>
    %58 = vector.broadcast %57 : vector<1x128xf32> to vector<16x128xf32>
    %59 = arith.addf %56, %58 : vector<16x128xf32>
    %60 = arith.addf %53, %59 : vector<16x128xf32>
    %cst_31 = arith.constant 0.000000e+00 : f32
    %61 = vector.broadcast %cst_31 : f32 to vector<16x128xf32>
    %62 = arith.maximumf %60, %61 : vector<16x128xf32>
    %c2_i32 = arith.constant 2 : i32
    %63 = vector.broadcast %c2_i32 : i32 to vector<16x1xi32>
    %64 = arith.cmpi sge, %17, %63 : vector<16x1xi32>
    %c2_i32_32 = arith.constant 2 : i32
    %65 = tpu.dynamic_rotate %62 by %c2_i32_32 dim 0 : vector<16x128xf32>, i32 -> vector<16x128xf32>
    %cst_33 = arith.constant 0.000000e+00 : f32
    %66 = vector.broadcast %cst_33 : f32 to vector<16x128xf32>
    %67 = vector.shape_cast %64 : vector<16x1xi1> to vector<16x1xi1>
    %68 = vector.broadcast %67 : vector<16x1xi1> to vector<16x128xi1>
    %69 = arith.select %68, %65, %66 : vector<16x128xi1>, vector<16x128xf32>
    %70 = arith.truncf %62 : vector<16x128xf32> to vector<16x128xbf16>
    %c0_34 = arith.constant 0 : index
    %c0_35 = arith.constant 0 : index
    %71 = vector.load %arg10[%c0_34, %c0_35] : memref<128x128xbf16, #tpu.memory_space<vmem>>, vector<128x128xbf16>
    %cst_36 = arith.constant dense<0.000000e+00> : vector<16x128xf32>
    %72 = tpu.matmul %70, %71, %cst_36 {dimension_numbers = #tpu.dot_dimension_numbers<[1], [0], [0], [1], [0, 0, 1, 1], [], []>} : vector<16x128xbf16>, vector<128x128xbf16>, vector<16x128xf32> -> vector<16x128xf32>
    %73 = arith.truncf %69 : vector<16x128xf32> to vector<16x128xbf16>
    %c0_37 = arith.constant 0 : index
    %c0_38 = arith.constant 0 : index
    %74 = vector.load %arg11[%c0_37, %c0_38] : memref<128x128xbf16, #tpu.memory_space<vmem>>, vector<128x128xbf16>
    %cst_39 = arith.constant dense<0.000000e+00> : vector<16x128xf32>
    %75 = tpu.matmul %73, %74, %cst_39 {dimension_numbers = #tpu.dot_dimension_numbers<[1], [0], [0], [1], [0, 0, 1, 1], [], []>} : vector<16x128xbf16>, vector<128x128xbf16>, vector<16x128xf32> -> vector<16x128xf32>
    %76 = arith.addf %72, %75 : vector<16x128xf32>
    %c0_40 = arith.constant 0 : index
    %c0_41 = arith.constant 0 : index
    %77 = vector.load %arg12[%c0_40, %c0_41] : memref<1x128xf32, #tpu.memory_space<vmem>>, vector<1x128xf32>
    %78 = vector.broadcast %77 : vector<1x128xf32> to vector<16x128xf32>
    %79 = arith.addf %76, %78 : vector<16x128xf32>
    %cst_42 = arith.constant 0.000000e+00 : f32
    %80 = vector.broadcast %cst_42 : f32 to vector<16x128xf32>
    %81 = arith.maximumf %79, %80 : vector<16x128xf32>
    %c2_i32_43 = arith.constant 2 : i32
    %82 = tpu.dynamic_rotate %81 by %c2_i32_43 dim 0 : vector<16x128xf32>, i32 -> vector<16x128xf32>
    %cst_44 = arith.constant 0.000000e+00 : f32
    %83 = vector.broadcast %cst_44 : f32 to vector<16x128xf32>
    %84 = vector.shape_cast %64 : vector<16x1xi1> to vector<16x1xi1>
    %85 = vector.broadcast %84 : vector<16x1xi1> to vector<16x128xi1>
    %86 = arith.select %85, %82, %83 : vector<16x128xi1>, vector<16x128xf32>
    %87 = arith.truncf %81 : vector<16x128xf32> to vector<16x128xbf16>
    %c0_45 = arith.constant 0 : index
    %c0_46 = arith.constant 0 : index
    %88 = vector.load %arg13[%c0_45, %c0_46] : memref<128x128xbf16, #tpu.memory_space<vmem>>, vector<128x128xbf16>
    %cst_47 = arith.constant dense<0.000000e+00> : vector<16x128xf32>
    %89 = tpu.matmul %87, %88, %cst_47 {dimension_numbers = #tpu.dot_dimension_numbers<[1], [0], [0], [1], [0, 0, 1, 1], [], []>} : vector<16x128xbf16>, vector<128x128xbf16>, vector<16x128xf32> -> vector<16x128xf32>
    %90 = arith.truncf %86 : vector<16x128xf32> to vector<16x128xbf16>
    %c0_48 = arith.constant 0 : index
    %c0_49 = arith.constant 0 : index
    %91 = vector.load %arg14[%c0_48, %c0_49] : memref<128x128xbf16, #tpu.memory_space<vmem>>, vector<128x128xbf16>
    %cst_50 = arith.constant dense<0.000000e+00> : vector<16x128xf32>
    %92 = tpu.matmul %90, %91, %cst_50 {dimension_numbers = #tpu.dot_dimension_numbers<[1], [0], [0], [1], [0, 0, 1, 1], [], []>} : vector<16x128xbf16>, vector<128x128xbf16>, vector<16x128xf32> -> vector<16x128xf32>
    %93 = arith.addf %89, %92 : vector<16x128xf32>
    %c0_51 = arith.constant 0 : index
    %c0_52 = arith.constant 0 : index
    %94 = vector.load %arg15[%c0_51, %c0_52] : memref<1x128xf32, #tpu.memory_space<vmem>>, vector<1x128xf32>
    %95 = vector.broadcast %94 : vector<1x128xf32> to vector<16x128xf32>
    %96 = arith.addf %93, %95 : vector<16x128xf32>
    %cst_53 = arith.constant 0.000000e+00 : f32
    %97 = vector.broadcast %cst_53 : f32 to vector<16x128xf32>
    %98 = arith.maximumf %96, %97 : vector<16x128xf32>
    %99 = arith.addf %98, %62 : vector<16x128xf32>
    %cst_54 = arith.constant 0.000000e+00 : f32
    %100 = vector.broadcast %cst_54 : f32 to vector<16x128xf32>
    %101 = arith.maximumf %99, %100 : vector<16x128xf32>
    %c0_55 = arith.constant 0 : index
    %c0_56 = arith.constant 0 : index
    %102 = vector.load %arg16[%c0_55, %c0_56] : memref<16x128xf32, #tpu.memory_space<vmem>>, vector<16x128xf32>
    tpu.vector_store %arg16[%c0_55, %c0_56], %101 {strides = array<i32>} : memref<16x128xf32, #tpu.memory_space<vmem>>, vector<16x128xf32>,
    return
  }
  func.func @transform_0(%arg0: i32) -> (i32, i32) {
    %c0_i32 = arith.constant 0 : i32
    %c0_i32_0 = arith.constant 0 : i32
    return %arg0, %c0_i32 : i32, i32
  }
  func.func @transform_1(%arg0: i32) -> (i32, i32) {
    %c0_i32 = arith.constant 0 : i32
    %c0_i32_0 = arith.constant 0 : i32
    %c0_i32_1 = arith.constant 0 : i32
    return %c0_i32, %c0_i32_0 : i32, i32
  }
  func.func @transform_2(%arg0: i32) -> (i32, i32) {
    %c0_i32 = arith.constant 0 : i32
    %c0_i32_0 = arith.constant 0 : i32
    %c0_i32_1 = arith.constant 0 : i32
    return %c0_i32, %c0_i32_0 : i32, i32
  }
  func.func @transform_3(%arg0: i32) -> (i32, i32) {
    %c0_i32 = arith.constant 0 : i32
    %c0_i32_0 = arith.constant 0 : i32
    %c0_i32_1 = arith.constant 0 : i32
    return %c0_i32, %c0_i32_0 : i32, i32
  }
  func.func @transform_4(%arg0: i32) -> (i32, i32) {
    %c0_i32 = arith.constant 0 : i32
    %c0_i32_0 = arith.constant 0 : i32
    %c0_i32_1 = arith.constant 0 : i32
    return %c0_i32, %c0_i32_0 : i32, i32
  }
  func.func @transform_5(%arg0: i32) -> (i32, i32) {
    %c0_i32 = arith.constant 0 : i32
    %c0_i32_0 = arith.constant 0 : i32
    %c0_i32_1 = arith.constant 0 : i32
    return %c0_i32, %c0_i32_0 : i32, i32
  }
  func.func @transform_6(%arg0: i32) -> (i32, i32) {
    %c0_i32 = arith.constant 0 : i32
    %c0_i32_0 = arith.constant 0 : i32
    %c0_i32_1 = arith.constant 0 : i32
    return %c0_i32, %c0_i32_0 : i32, i32
  }
  func.func @transform_7(%arg0: i32) -> (i32, i32) {
    %c0_i32 = arith.constant 0 : i32
    %c0_i32_0 = arith.constant 0 : i32
    %c0_i32_1 = arith.constant 0 : i32
    return %c0_i32, %c0_i32_0 : i32, i32
  }
  func.func @transform_8(%arg0: i32) -> (i32, i32) {
    %c0_i32 = arith.constant 0 : i32
    %c0_i32_0 = arith.constant 0 : i32
    %c0_i32_1 = arith.constant 0 : i32
    return %c0_i32, %c0_i32_0 : i32, i32
  }
  func.func @transform_9(%arg0: i32) -> (i32, i32) {
    %c0_i32 = arith.constant 0 : i32
    %c0_i32_0 = arith.constant 0 : i32
    %c0_i32_1 = arith.constant 0 : i32
    return %c0_i32, %c0_i32_0 : i32, i32
  }
  func.func @transform_10(%arg0: i32) -> (i32, i32) {
    %c0_i32 = arith.constant 0 : i32
    %c0_i32_0 = arith.constant 0 : i32
    %c0_i32_1 = arith.constant 0 : i32
    return %c0_i32, %c0_i32_0 : i32, i32
  }
  func.func @transform_11(%arg0: i32) -> (i32, i32) {
    %c0_i32 = arith.constant 0 : i32
    %c0_i32_0 = arith.constant 0 : i32
    %c0_i32_1 = arith.constant 0 : i32
    return %c0_i32, %c0_i32_0 : i32, i32
  }
  func.func @transform_12(%arg0: i32) -> (i32, i32) {
    %c0_i32 = arith.constant 0 : i32
    %c0_i32_0 = arith.constant 0 : i32
    %c0_i32_1 = arith.constant 0 : i32
    return %c0_i32, %c0_i32_0 : i32, i32
  }
  func.func @transform_13(%arg0: i32) -> (i32, i32) {
    %c0_i32 = arith.constant 0 : i32
    %c0_i32_0 = arith.constant 0 : i32
    %c0_i32_1 = arith.constant 0 : i32
    return %c0_i32, %c0_i32_0 : i32, i32
  }
  func.func @transform_14(%arg0: i32) -> (i32, i32) {
    %c0_i32 = arith.constant 0 : i32
    %c0_i32_0 = arith.constant 0 : i32
    %c0_i32_1 = arith.constant 0 : i32
    return %c0_i32, %c0_i32_0 : i32, i32
  }
  func.func @transform_15(%arg0: i32) -> (i32, i32) {
    %c0_i32 = arith.constant 0 : i32
    %c0_i32_0 = arith.constant 0 : i32
    return %arg0, %c0_i32 : i32, i32
  }
}

</mosaic_0001>

<llo_original>
// kernel: tpu_custom_call.1
$region0: #{tpu_custom_call.1}
  #allocation0 [shape = 'u32[]', space=smem, size = 0x4, offset = 0x4, fixed_abs, tag = 'smem constant byte address 0x4 - core index']
  #allocation1 [shape = 'u32[144,128]{1,0:T(1,128)}', space=vmem, size = 0x12000, scoped, tag = 'internal scratch']
  %s0 = inlined_call_operand.hbm [shape: f32[32,128], index: 0, kind: input, shape index: {}]
  %s1 = inlined_call_operand.hbm [shape: bf16[128,128], index: 1, kind: input, shape index: {}]
  %s2 = inlined_call_operand.hbm [shape: bf16[128,128], index: 2, kind: input, shape index: {}]
  %s3 = inlined_call_operand.vmem [shape: f32[1,128], index: 3, kind: input, shape index: {}]
  %s4 = inlined_call_operand.hbm [shape: bf16[128,128], index: 4, kind: input, shape index: {}]
  %s5 = inlined_call_operand.hbm [shape: bf16[128,128], index: 5, kind: input, shape index: {}]
  %s6 = inlined_call_operand.vmem [shape: f32[1,128], index: 6, kind: input, shape index: {}]
  %s7 = inlined_call_operand.hbm [shape: bf16[128,128], index: 7, kind: input, shape index: {}]
  %s8 = inlined_call_operand.vmem [shape: f32[1,128], index: 8, kind: input, shape index: {}]
  %s9 = inlined_call_operand.hbm [shape: bf16[128,128], index: 9, kind: input, shape index: {}]
  %s10 = inlined_call_operand.hbm [shape: bf16[128,128], index: 10, kind: input, shape index: {}]
  %s11 = inlined_call_operand.vmem [shape: f32[1,128], index: 11, kind: input, shape index: {}]
  %s12 = inlined_call_operand.hbm [shape: bf16[128,128], index: 12, kind: input, shape index: {}]
  %s13 = inlined_call_operand.hbm [shape: bf16[128,128], index: 13, kind: input, shape index: {}]
  %s14 = inlined_call_operand.vmem [shape: f32[1,128], index: 14, kind: input, shape index: {}]
  %s15 = inlined_call_operand.hbm [shape: f32[32,128], index: 15, kind: output, shape index: {}]
  %s16 = sld [smem:[#allocation0]]
  $region133: #{tpu_custom_call.1} parent=0
    _
  %s18 = ssub.s32 1, %s16
  %s19 = scalar_select 0, %s18, %s16
  $region1: #{tpu_custom_call.1} parent=0
    #allocation2 [shape = 'u8[16384]{0}', space=vmem, size = 0x4000, scoped, tag = 'input window, operand 0']
    #allocation3 [shape = 's32[2]{0}', space=sflag, size = 0x8, scoped, tag = 'scoped memory for tpu_custom_call.1']
    #allocation4 [shape = 's32[2]{0}', space=sflag, size = 0x8, scoped, tag = 'scoped memory for tpu_custom_call.1']
    #allocation5 [shape = 'u8[32768]{0}', space=vmem, size = 0x8000, scoped, tag = 'input window, operand 1, single buffered']
    #allocation6 [shape = 's32[1]{0}', space=sflag, size = 0x4, scoped, tag = 'scoped memory for tpu_custom_call.1']
    #allocation7 [shape = 'u8[32768]{0}', space=vmem, size = 0x8000, scoped, tag = 'input window, operand 2, single buffered']
    #allocation8 [shape = 'u8[32768]{0}', space=vmem, size = 0x8000, scoped, tag = 'input window, operand 4, single buffered']
    #allocation9 [shape = 's32[1]{0}', space=sflag, size = 0x4, scoped, tag = 'scoped memory for tpu_custom_call.1']
    #allocation10 [shape = 'u8[32768]{0}', space=vmem, size = 0x8000, scoped, tag = 'input window, operand 5, single buffered']
    #allocation11 [shape = 'u8[32768]{0}', space=vmem, size = 0x8000, scoped, tag = 'input window, operand 7, single buffered']
    #allocation12 [shape = 's32[1]{0}', space=sflag, size = 0x4, scoped, tag = 'scoped memory for tpu_custom_call.1']
    #allocation13 [shape = 'u8[32768]{0}', space=vmem, size = 0x8000, scoped, tag = 'input window, operand 9, single buffered']
    #allocation14 [shape = 'u8[32768]{0}', space=vmem, size = 0x8000, scoped, tag = 'input window, operand 10, single buffered']
    #allocation15 [shape = 's32[1]{0}', space=sflag, size = 0x4, scoped, tag = 'scoped memory for tpu_custom_call.1']
    #allocation16 [shape = 'u8[32768]{0}', space=vmem, size = 0x8000, scoped, tag = 'input window, operand 12, single buffered']
    #allocation17 [shape = 'u8[32768]{0}', space=vmem, size = 0x8000, scoped, tag = 'input window, operand 13, single buffered']
    #allocation18 [shape = 's32[1]{0}', space=sflag, size = 0x4, scoped, tag = 'scoped memory for tpu_custom_call.1']
    #allocation19 [shape = 'u8[16384]{0}', space=vmem, size = 0x4000, scoped, tag = 'output window, operand 0']
    %20 = vsyncpa [#allocation3], 0
    %s21 = scalar_lea.sflag [#allocation3], 1
    %22 = vsyncpa %s21, 0
    %23 = vsyncpa [#allocation6], 0
    %24 = vsyncpa [#allocation9], 0
    %25 = vsyncpa [#allocation12], 0
    %26 = vsyncpa [#allocation15], 0
    %27 = vsyncpa [#allocation18], 0
    %28 = vsyncpa [#allocation4], 0
    %s29 = scalar_lea.sflag [#allocation4], 1
    %30 = vsyncpa %s29, 0
    loop: start=0, step=1, limit=4
    $region2: #{tpu_custom_call.1} parent=1 // loop_pre_header
      _
    $region3: #{tpu_custom_call.1} parent=1 // loop_header
      %s32 = sphi 0, %s36
      %p33 = scmp.ge.s32.totalorder %s32, 4
      %s42 = sphi 0, %s44
      %s45 = sphi 0, %s42
      %s46 = sphi 0, %s45
      %s62 = sphi 0, %s46
      %s66 = sphi 0, %s66
      %s68 = sphi 0, %s66
      %s69 = sphi 0, %s68
      %s83 = sphi 0, %s69
      %s87 = sphi 0, %s87
      %s89 = sphi 0, %s87
      %s90 = sphi 0, %s89
      %s104 = sphi 0, %s90
      %s108 = sphi 0, %s108
      %s110 = sphi 0, %s108
      %s111 = sphi 0, %s110
      %s125 = sphi 0, %s111
      %s129 = sphi 0, %s129
      %s131 = sphi 0, %s129
      %s132 = sphi 0, %s131
      %s146 = sphi 0, %s132
      %s150 = sphi 0, %s150
      %s152 = sphi 0, %s150
      %s153 = sphi 0, %s152
      %s167 = sphi 0, %s153
      %s171 = sphi 0, %s171
      %s173 = sphi 0, %s171
      %s174 = sphi 0, %s173
      %s188 = sphi 0, %s174
      %s192 = sphi 0, %s192
      %s194 = sphi 0, %s192
      %s195 = sphi 0, %s194
      %s209 = sphi 0, %s195
      %s213 = sphi 0, %s213
      %s215 = sphi 0, %s213
      %s216 = sphi 0, %s215
      %s230 = sphi 0, %s216
      %s234 = sphi 0, %s234
      %s236 = sphi 0, %s234
      %s237 = sphi 0, %s236
      %s251 = sphi 0, %s237
      %s255 = sphi 0, %s255
      %s257 = sphi 0, %s255
      %s258 = sphi 0, %s257
      %s272 = sphi 0, %s258
      %s276 = sphi 0, %s276
      %s278 = sphi 0, %s276
      %s279 = sphi 0, %s278
      %s293 = sphi 0, %s279
      %s297 = sphi 0, %s297
      %s299 = sphi 0, %s297
      %s300 = sphi 0, %s299
      %s314 = sphi 0, %s300
      %s318 = sphi 0, %s318
      %s320 = sphi 0, %s318
      %s321 = sphi 0, %s320
      %s335 = sphi 0, %s321
      %s339 = sphi 0, %s339
      %s341 = sphi 0, %s339
      %s342 = sphi 0, %s341
      %s356 = sphi 0, %s342
      %s362 = sphi 0, %s364
      %s365 = sphi 0, %s362
      %s366 = sphi 0, %s365
      %s382 = sphi 0, %s366
    $region4: #{tpu_custom_call.1} parent=1 // loop_header_branch
      %35 = sbr.rel (%p33) target = $region8
    $region5: #{tpu_custom_call.1} parent=1 // loop_body
      %s37 = ssub.s32 %s32, 1
      %s38 = ssub.s32 %s32, 2
      %s39 = sadd.s32 %s32, 1
      %s40 = ssub.s32 %s32, %s39
      %p41 = scmp.eq.s32.totalorder %s40, 0
      %s43 = sadd.s32 %s42, 1
      %s44 = scalar_select %p41, %s42, %s43
      %p47 = pneg %p41
      %p48 = scmp.eq.s32.totalorder %s32, 1
      %p49 = por %p47, %p48
      %p50 = scmp.ne.s32.totalorder %s42, %s45
      %p51 = scmp.eq.s32.totalorder %s32, 0
      %p52 = por %p50, %p51
      %p53 = scmp.ne.s32.totalorder %s42, %s45
      %p54 = scmp.eq.s32.totalorder %s37, 1
      %p55 = por %p53, %p54
      %p56 = scmp.ne.s32.totalorder %s45, %s46
      %p57 = scmp.eq.s32.totalorder %s37, 0
      %p58 = por %p56, %p57
      %p59 = scmp.ne.s32.totalorder %s45, %s46
      %p60 = scmp.eq.s32.totalorder %s38, 1
      %p61 = por %p59, %p60
      %p63 = scmp.ne.s32.totalorder %s46, %s62
      %p64 = scmp.eq.s32.totalorder %s38, 0
      %p65 = por %p63, %p64
      %s67 = sadd.s32 %s66, 1
      %p70 = scmp.eq.s32.totalorder %s32, 1
      %p71 = scmp.ne.s32.totalorder %s66, %s68
      %p72 = scmp.eq.s32.totalorder %s32, 0
      %p73 = por %p71, %p72
      %p74 = scmp.ne.s32.totalorder %s66, %s68
      %p75 = scmp.eq.s32.totalorder %s37, 1
      %p76 = por %p74, %p75
      %p77 = scmp.ne.s32.totalorder %s68, %s69
      %p78 = scmp.eq.s32.totalorder %s37, 0
      %p79 = por %p77, %p78
      %p80 = scmp.ne.s32.totalorder %s68, %s69
      %p81 = scmp.eq.s32.totalorder %s38, 1
      %p82 = por %p80, %p81
      %p84 = scmp.ne.s32.totalorder %s69, %s83
      %p85 = scmp.eq.s32.totalorder %s38, 0
      %p86 = por %p84, %p85
      %s88 = sadd.s32 %s87, 1
      %p91 = scmp.eq.s32.totalorder %s32, 1
      %p92 = scmp.ne.s32.totalorder %s87, %s89
      %p93 = scmp.eq.s32.totalorder %s32, 0
      %p94 = por %p92, %p93
      %p95 = scmp.ne.s32.totalorder %s87, %s89
      %p96 = scmp.eq.s32.totalorder %s37, 1
      %p97 = por %p95, %p96
      %p98 = scmp.ne.s32.totalorder %s89, %s90
      %p99 = scmp.eq.s32.totalorder %s37, 0
      %p100 = por %p98, %p99
      %p101 = scmp.ne.s32.totalorder %s89, %s90
      %p102 = scmp.eq.s32.totalorder %s38, 1
      %p103 = por %p101, %p102
      %p105 = scmp.ne.s32.totalorder %s90, %s104
      %p106 = scmp.eq.s32.totalorder %s38, 0
      %p107 = por %p105, %p106
      %s109 = sadd.s32 %s108, 1
      %p112 = scmp.eq.s32.totalorder %s32, 1
      %p113 = scmp.ne.s32.totalorder %s108, %s110
      %p114 = scmp.eq.s32.totalorder %s32, 0
      %p115 = por %p113, %p114
      %p116 = scmp.ne.s32.totalorder %s108, %s110
      %p117 = scmp.eq.s32.totalorder %s37, 1
      %p118 = por %p116, %p117
      %p119 = scmp.ne.s32.totalorder %s110, %s111
      %p120 = scmp.eq.s32.totalorder %s37, 0
      %p121 = por %p119, %p120
      %p122 = scmp.ne.s32.totalorder %s110, %s111
      %p123 = scmp.eq.s32.totalorder %s38, 1
      %p124 = por %p122, %p123
      %p126 = scmp.ne.s32.totalorder %s111, %s125
      %p127 = scmp.eq.s32.totalorder %s38, 0
      %p128 = por %p126, %p127
      %s130 = sadd.s32 %s129, 1
      %p133 = scmp.eq.s32.totalorder %s32, 1
      %p134 = scmp.ne.s32.totalorder %s129, %s131
      %p135 = scmp.eq.s32.totalorder %s32, 0
      %p136 = por %p134, %p135
      %p137 = scmp.ne.s32.totalorder %s129, %s131
      %p138 = scmp.eq.s32.totalorder %s37, 1
      %p139 = por %p137, %p138
      %p140 = scmp.ne.s32.totalorder %s131, %s132
      %p141 = scmp.eq.s32.totalorder %s37, 0
      %p142 = por %p140, %p141
      %p143 = scmp.ne.s32.totalorder %s131, %s132
      %p144 = scmp.eq.s32.totalorder %s38, 1
      %p145 = por %p143, %p144
      %p147 = scmp.ne.s32.totalorder %s132, %s146
      %p148 = scmp.eq.s32.totalorder %s38, 0
      %p149 = por %p147, %p148
      %s151 = sadd.s32 %s150, 1
      %p154 = scmp.eq.s32.totalorder %s32, 1
      %p155 = scmp.ne.s32.totalorder %s150, %s152
      %p156 = scmp.eq.s32.totalorder %s32, 0
      %p157 = por %p155, %p156
      %p158 = scmp.ne.s32.totalorder %s150, %s152
      %p159 = scmp.eq.s32.totalorder %s37, 1
      %p160 = por %p158, %p159
      %p161 = scmp.ne.s32.totalorder %s152, %s153
      %p162 = scmp.eq.s32.totalorder %s37, 0
      %p163 = por %p161, %p162
      %p164 = scmp.ne.s32.totalorder %s152, %s153
      %p165 = scmp.eq.s32.totalorder %s38, 1
      %p166 = por %p164, %p165
      %p168 = scmp.ne.s32.totalorder %s153, %s167
      %p169 = scmp.eq.s32.totalorder %s38, 0
      %p170 = por %p168, %p169
      %s172 = sadd.s32 %s171, 1
      %p175 = scmp.eq.s32.totalorder %s32, 1
      %p176 = scmp.ne.s32.totalorder %s171, %s173
      %p177 = scmp.eq.s32.totalorder %s32, 0
      %p178 = por %p176, %p177
      %p179 = scmp.ne.s32.totalorder %s171, %s173
      %p180 = scmp.eq.s32.totalorder %s37, 1
      %p181 = por %p179, %p180
      %p182 = scmp.ne.s32.totalorder %s173, %s174
      %p183 = scmp.eq.s32.totalorder %s37, 0
      %p184 = por %p182, %p183
      %p185 = scmp.ne.s32.totalorder %s173, %s174
      %p186 = scmp.eq.s32.totalorder %s38, 1
      %p187 = por %p185, %p186
      %p189 = scmp.ne.s32.totalorder %s174, %s188
      %p190 = scmp.eq.s32.totalorder %s38, 0
      %p191 = por %p189, %p190
      %s193 = sadd.s32 %s192, 1
      %p196 = scmp.eq.s32.totalorder %s32, 1
      %p197 = scmp.ne.s32.totalorder %s192, %s194
      %p198 = scmp.eq.s32.totalorder %s32, 0
      %p199 = por %p197, %p198
      %p200 = scmp.ne.s32.totalorder %s192, %s194
      %p201 = scmp.eq.s32.totalorder %s37, 1
      %p202 = por %p200, %p201
      %p203 = scmp.ne.s32.totalorder %s194, %s195
      %p204 = scmp.eq.s32.totalorder %s37, 0
      %p205 = por %p203, %p204
      %p206 = scmp.ne.s32.totalorder %s194, %s195
      %p207 = scmp.eq.s32.totalorder %s38, 1
      %p208 = por %p206, %p207
      %p210 = scmp.ne.s32.totalorder %s195, %s209
      %p211 = scmp.eq.s32.totalorder %s38, 0
      %p212 = por %p210, %p211
      %s214 = sadd.s32 %s213, 1
      %p217 = scmp.eq.s32.totalorder %s32, 1
      %p218 = scmp.ne.s32.totalorder %s213, %s215
      %p219 = scmp.eq.s32.totalorder %s32, 0
      %p220 = por %p218, %p219
      %p221 = scmp.ne.s32.totalorder %s213, %s215
      %p222 = scmp.eq.s32.totalorder %s37, 1
      %p223 = por %p221, %p222
      %p224 = scmp.ne.s32.totalorder %s215, %s216
      %p225 = scmp.eq.s32.totalorder %s37, 0
      %p226 = por %p224, %p225
      %p227 = scmp.ne.s32.totalorder %s215, %s216
      %p228 = scmp.eq.s32.totalorder %s38, 1
      %p229 = por %p227, %p228
      %p231 = scmp.ne.s32.totalorder %s216, %s230
      %p232 = scmp.eq.s32.totalorder %s38, 0
      %p233 = por %p231, %p232
      %s235 = sadd.s32 %s234, 1
      %p238 = scmp.eq.s32.totalorder %s32, 1
      %p239 = scmp.ne.s32.totalorder %s234, %s236
      %p240 = scmp.eq.s32.totalorder %s32, 0
      %p241 = por %p239, %p240
      %p242 = scmp.ne.s32.totalorder %s234, %s236
      %p243 = scmp.eq.s32.totalorder %s37, 1
      %p244 = por %p242, %p243
      %p245 = scmp.ne.s32.totalorder %s236, %s237
      %p246 = scmp.eq.s32.totalorder %s37, 0
      %p247 = por %p245, %p246
      %p248 = scmp.ne.s32.totalorder %s236, %s237
      %p249 = scmp.eq.s32.totalorder %s38, 1
      %p250 = por %p248, %p249
      %p252 = scmp.ne.s32.totalorder %s237, %s251
      %p253 = scmp.eq.s32.totalorder %s38, 0
      %p254 = por %p252, %p253
      %s256 = sadd.s32 %s255, 1
      %p259 = scmp.eq.s32.totalorder %s32, 1
      %p260 = scmp.ne.s32.totalorder %s255, %s257
      %p261 = scmp.eq.s32.totalorder %s32, 0
      %p262 = por %p260, %p261
      %p263 = scmp.ne.s32.totalorder %s255, %s257
      %p264 = scmp.eq.s32.totalorder %s37, 1
      %p265 = por %p263, %p264
      %p266 = scmp.ne.s32.totalorder %s257, %s258
      %p267 = scmp.eq.s32.totalorder %s37, 0
      %p268 = por %p266, %p267
      %p269 = scmp.ne.s32.totalorder %s257, %s258
      %p270 = scmp.eq.s32.totalorder %s38, 1
      %p271 = por %p269, %p270
      %p273 = scmp.ne.s32.totalorder %s258, %s272
      %p274 = scmp.eq.s32.totalorder %s38, 0
      %p275 = por %p273, %p274
      %s277 = sadd.s32 %s276, 1
      %p280 = scmp.eq.s32.totalorder %s32, 1
      %p281 = scmp.ne.s32.totalorder %s276, %s278
      %p282 = scmp.eq.s32.totalorder %s32, 0
      %p283 = por %p281, %p282
      %p284 = scmp.ne.s32.totalorder %s276, %s278
      %p285 = scmp.eq.s32.totalorder %s37, 1
      %p286 = por %p284, %p285
      %p287 = scmp.ne.s32.totalorder %s278, %s279
      %p288 = scmp.eq.s32.totalorder %s37, 0
      %p289 = por %p287, %p288
      %p290 = scmp.ne.s32.totalorder %s278, %s279
      %p291 = scmp.eq.s32.totalorder %s38, 1
      %p292 = por %p290, %p291
      %p294 = scmp.ne.s32.totalorder %s279, %s293
      %p295 = scmp.eq.s32.totalorder %s38, 0
      %p296 = por %p294, %p295
      %s298 = sadd.s32 %s297, 1
      %p301 = scmp.eq.s32.totalorder %s32, 1
      %p302 = scmp.ne.s32.totalorder %s297, %s299
      %p303 = scmp.eq.s32.totalorder %s32, 0
      %p304 = por %p302, %p303
      %p305 = scmp.ne.s32.totalorder %s297, %s299
      %p306 = scmp.eq.s32.totalorder %s37, 1
      %p307 = por %p305, %p306
      %p308 = scmp.ne.s32.totalorder %s299, %s300
      %p309 = scmp.eq.s32.totalorder %s37, 0
      %p310 = por %p308, %p309
      %p311 = scmp.ne.s32.totalorder %s299, %s300
      %p312 = scmp.eq.s32.totalorder %s38, 1
      %p313 = por %p311, %p312
      %p315 = scmp.ne.s32.totalorder %s300, %s314
      %p316 = scmp.eq.s32.totalorder %s38, 0
      %p317 = por %p315, %p316
      %s319 = sadd.s32 %s318, 1
      %p322 = scmp.eq.s32.totalorder %s32, 1
      %p323 = scmp.ne.s32.totalorder %s318, %s320
      %p324 = scmp.eq.s32.totalorder %s32, 0
      %p325 = por %p323, %p324
      %p326 = scmp.ne.s32.totalorder %s318, %s320
      %p327 = scmp.eq.s32.totalorder %s37, 1
      %p328 = por %p326, %p327
      %p329 = scmp.ne.s32.totalorder %s320, %s321
      %p330 = scmp.eq.s32.totalorder %s37, 0
      %p331 = por %p329, %p330
      %p332 = scmp.ne.s32.totalorder %s320, %s321
      %p333 = scmp.eq.s32.totalorder %s38, 1
      %p334 = por %p332, %p333
      %p336 = scmp.ne.s32.totalorder %s321, %s335
      %p337 = scmp.eq.s32.totalorder %s38, 0
      %p338 = por %p336, %p337
      %s340 = sadd.s32 %s339, 1
      %p343 = scmp.eq.s32.totalorder %s32, 1
      %p344 = scmp.ne.s32.totalorder %s339, %s341
      %p345 = scmp.eq.s32.totalorder %s32, 0
      %p346 = por %p344, %p345
      %p347 = scmp.ne.s32.totalorder %s339, %s341
      %p348 = scmp.eq.s32.totalorder %s37, 1
      %p349 = por %p347, %p348
      %p350 = scmp.ne.s32.totalorder %s341, %s342
      %p351 = scmp.eq.s32.totalorder %s37, 0
      %p352 = por %p350, %p351
      %p353 = scmp.ne.s32.totalorder %s341, %s342
      %p354 = scmp.eq.s32.totalorder %s38, 1
      %p355 = por %p353, %p354
      %p357 = scmp.ne.s32.totalorder %s342, %s356
      %p358 = scmp.eq.s32.totalorder %s38, 0
      %p359 = por %p357, %p358
      %s360 = ssub.s32 %s32, %s39
      %p361 = scmp.eq.s32.totalorder %s360, 0
      %s363 = sadd.s32 %s362, 1
      %s364 = scalar_select %p361, %s362, %s363
      %p367 = pneg %p361
      %p368 = scmp.eq.s32.totalorder %s32, 1
      %p369 = por %p367, %p368
      %p370 = scmp.ne.s32.totalorder %s362, %s365
      %p371 = scmp.eq.s32.totalorder %s32, 0
      %p372 = por %p370, %p371
      %p373 = scmp.ne.s32.totalorder %s362, %s365
      %p374 = scmp.eq.s32.totalorder %s37, 1
      %p375 = por %p373, %p374
      %p376 = scmp.ne.s32.totalorder %s365, %s366
      %p377 = scmp.eq.s32.totalorder %s37, 0
      %p378 = por %p376, %p377
      %p379 = scmp.ne.s32.totalorder %s365, %s366
      %p380 = scmp.eq.s32.totalorder %s38, 1
      %p381 = por %p379, %p380
      %p383 = scmp.ne.s32.totalorder %s366, %s382
      %p384 = scmp.eq.s32.totalorder %s38, 0
      %p385 = por %p383, %p384
      %p386 = scmp.le.s32.totalorder 1, %s32
      %p387 = scmp.lt.s32.totalorder %s32, 3
      %p388 = pnand %p386, %p387
      %p389 = pneg %p388
      // Predicated region
      $region9: #{tpu_custom_call.1} parent=5 // pred_check
        _
      $region10: #{tpu_custom_call.1} parent=5 // pred_check_branch
        %391 = sbr.rel (%p388) target = $region12
      $region11: #{tpu_custom_call.1} parent=5 // pred_region
        %s392 = ssub.s32 %s32, 1
        // Predicated region
        $region13: #{tpu_custom_call.1} parent=11 // pred_check
          %p393 = pneg %p79
        $region14: #{tpu_custom_call.1} parent=11 // pred_check_branch
          %395 = sbr.rel (%p393) target = $region16
        $region15: #{tpu_custom_call.1} parent=11 // pred_region
          %s397 = ssub.s32 1024, 1024
          %398 = vsyncadd [#allocation6], %s397
          %s399 = sshll.u32 [#allocation5], 4
          %s400 = int_to_ptr.vmem [resolvable:$true] %s399
          %405 = dma.hbm_to_vmem [thread:$0]  %s1, 1024, %s400, [#allocation6], 64, 64, 4
        $region16: #{tpu_custom_call.1} parent=11 // pred_fallthru
          _
        // Predicated region
        $region17: #{tpu_custom_call.1} parent=11 // pred_check
          %p406 = pneg %p100
        $region18: #{tpu_custom_call.1} parent=11 // pred_check_branch
          %408 = sbr.rel (%p406) target = $region20
        $region19: #{tpu_custom_call.1} parent=11 // pred_region
          %s410 = ssub.s32 1024, 1024
          %411 = vsyncadd [#allocation6], %s410
          %s412 = sshll.u32 [#allocation7], 4
          %s413 = int_to_ptr.vmem [resolvable:$true] %s412
          %418 = dma.hbm_to_vmem [thread:$0]  %s2, 1024, %s413, [#allocation6], 64, 64, 4
        $region20: #{tpu_custom_call.1} parent=11 // pred_fallthru
          _
        // Predicated region
        $region21: #{tpu_custom_call.1} parent=11 // pred_check
          %p419 = pneg %p121
        $region22: #{tpu_custom_call.1} parent=11 // pred_check_branch
          %421 = sbr.rel (%p419) target = $region24
        $region23: #{tpu_custom_call.1} parent=11 // pred_region
          _
        $region24: #{tpu_custom_call.1} parent=11 // pred_fallthru
          _
        // Predicated region
        $region25: #{tpu_custom_call.1} parent=11 // pred_check
          %p422 = pneg %p142
        $region26: #{tpu_custom_call.1} parent=11 // pred_check_branch
          %424 = sbr.rel (%p422) target = $region28
        $region27: #{tpu_custom_call.1} parent=11 // pred_region
          %s426 = ssub.s32 1024, 1024
          %427 = vsyncadd [#allocation9], %s426
          %s428 = sshll.u32 [#allocation8], 4
          %s429 = int_to_ptr.vmem [resolvable:$true] %s428
          %434 = dma.hbm_to_vmem [thread:$0]  %s4, 1024, %s429, [#allocation9], 64, 64, 4
        $region28: #{tpu_custom_call.1} parent=11 // pred_fallthru
          _
        // Predicated region
        $region29: #{tpu_custom_call.1} parent=11 // pred_check
          %p435 = pneg %p163
        $region30: #{tpu_custom_call.1} parent=11 // pred_check_branch
          %437 = sbr.rel (%p435) target = $region32
        $region31: #{tpu_custom_call.1} parent=11 // pred_region
          %s439 = ssub.s32 1024, 1024
          %440 = vsyncadd [#allocation9], %s439
          %s441 = sshll.u32 [#allocation10], 4
          %s442 = int_to_ptr.vmem [resolvable:$true] %s441
          %447 = dma.hbm_to_vmem [thread:$0]  %s5, 1024, %s442, [#allocation9], 64, 64, 4
        $region32: #{tpu_custom_call.1} parent=11 // pred_fallthru
          _
        // Predicated region
        $region33: #{tpu_custom_call.1} parent=11 // pred_check
          %p448 = pneg %p184
        $region34: #{tpu_custom_call.1} parent=11 // pred_check_branch
          %450 = sbr.rel (%p448) target = $region36
        $region35: #{tpu_custom_call.1} parent=11 // pred_region
          _
        $region36: #{tpu_custom_call.1} parent=11 // pred_fallthru
          _
        // Predicated region
        $region37: #{tpu_custom_call.1} parent=11 // pred_check
          %p451 = pneg %p205
        $region38: #{tpu_custom_call.1} parent=11 // pred_check_branch
          %453 = sbr.rel (%p451) target = $region40
        $region39: #{tpu_custom_call.1} parent=11 // pred_region
          %s455 = ssub.s32 1024, 1024
          %456 = vsyncadd [#allocation12], %s455
          %s457 = sshll.u32 [#allocation11], 4
          %s458 = int_to_ptr.vmem [resolvable:$true] %s457
          %463 = dma.hbm_to_vmem [thread:$0]  %s7, 1024, %s458, [#allocation12], 64, 64, 4
        $region40: #{tpu_custom_call.1} parent=11 // pred_fallthru
          _
        // Predicated region
        $region41: #{tpu_custom_call.1} parent=11 // pred_check
          %p464 = pneg %p226
        $region42: #{tpu_custom_call.1} parent=11 // pred_check_branch
          %466 = sbr.rel (%p464) target = $region44
        $region43: #{tpu_custom_call.1} parent=11 // pred_region
          _
        $region44: #{tpu_custom_call.1} parent=11 // pred_fallthru
          _
        // Predicated region
        $region45: #{tpu_custom_call.1} parent=11 // pred_check
          %p467 = pneg %p247
        $region46: #{tpu_custom_call.1} parent=11 // pred_check_branch
          %469 = sbr.rel (%p467) target = $region48
        $region47: #{tpu_custom_call.1} parent=11 // pred_region
          %s471 = ssub.s32 1024, 1024
          %472 = vsyncadd [#allocation12], %s471
          %s473 = sshll.u32 [#allocation13], 4
          %s474 = int_to_ptr.vmem [resolvable:$true] %s473
          %479 = dma.hbm_to_vmem [thread:$0]  %s9, 1024, %s474, [#allocation12], 64, 64, 4
        $region48: #{tpu_custom_call.1} parent=11 // pred_fallthru
          _
        // Predicated region
        $region49: #{tpu_custom_call.1} parent=11 // pred_check
          %p480 = pneg %p268
        $region50: #{tpu_custom_call.1} parent=11 // pred_check_branch
          %482 = sbr.rel (%p480) target = $region52
        $region51: #{tpu_custom_call.1} parent=11 // pred_region
          %s484 = ssub.s32 1024, 1024
          %485 = vsyncadd [#allocation15], %s484
          %s486 = sshll.u32 [#allocation14], 4
          %s487 = int_to_ptr.vmem [resolvable:$true] %s486
          %492 = dma.hbm_to_vmem [thread:$0]  %s10, 1024, %s487, [#allocation15], 64, 64, 4
        $region52: #{tpu_custom_call.1} parent=11 // pred_fallthru
          _
        // Predicated region
        $region53: #{tpu_custom_call.1} parent=11 // pred_check
          %p493 = pneg %p289
        $region54: #{tpu_custom_call.1} parent=11 // pred_check_branch
          %495 = sbr.rel (%p493) target = $region56
        $region55: #{tpu_custom_call.1} parent=11 // pred_region
          _
        $region56: #{tpu_custom_call.1} parent=11 // pred_fallthru
          _
        // Predicated region
        $region57: #{tpu_custom_call.1} parent=11 // pred_check
          %p496 = pneg %p310
        $region58: #{tpu_custom_call.1} parent=11 // pred_check_branch
          %498 = sbr.rel (%p496) target = $region60
        $region59: #{tpu_custom_call.1} parent=11 // pred_region
          %s500 = ssub.s32 1024, 1024
          %501 = vsyncadd [#allocation15], %s500
          %s502 = sshll.u32 [#allocation16], 4
          %s503 = int_to_ptr.vmem [resolvable:$true] %s502
          %508 = dma.hbm_to_vmem [thread:$0]  %s12, 1024, %s503, [#allocation15], 64, 64, 4
        $region60: #{tpu_custom_call.1} parent=11 // pred_fallthru
          _
        // Predicated region
        $region61: #{tpu_custom_call.1} parent=11 // pred_check
          %p509 = pneg %p331
        $region62: #{tpu_custom_call.1} parent=11 // pred_check_branch
          %511 = sbr.rel (%p509) target = $region64
        $region63: #{tpu_custom_call.1} parent=11 // pred_region
          %s513 = ssub.s32 1024, 1024
          %514 = vsyncadd [#allocation18], %s513
          %s515 = sshll.u32 [#allocation17], 4
          %s516 = int_to_ptr.vmem [resolvable:$true] %s515
          %521 = dma.hbm_to_vmem [thread:$0]  %s13, 1024, %s516, [#allocation18], 64, 64, 4
        $region64: #{tpu_custom_call.1} parent=11 // pred_fallthru
          _
        // Predicated region
        $region65: #{tpu_custom_call.1} parent=11 // pred_check
          %p522 = pneg %p352
        $region66: #{tpu_custom_call.1} parent=11 // pred_check_branch
          %524 = sbr.rel (%p522) target = $region68
        $region67: #{tpu_custom_call.1} parent=11 // pred_region
          _
        $region68: #{tpu_custom_call.1} parent=11 // pred_fallthru
          _
      $region12: #{tpu_custom_call.1} parent=5 // pred_fallthru
        _
      %p525 = scmp.lt.s32.totalorder %s32, 2
      // Predicated region
      $region69: #{tpu_custom_call.1} parent=5 // pred_check
        %p526 = pneg %p525
      $region70: #{tpu_custom_call.1} parent=5 // pred_check_branch
        %528 = sbr.rel (%p526) target = $region72
      $region71: #{tpu_custom_call.1} parent=5 // pred_region
        // Predicated region
        $region73: #{tpu_custom_call.1} parent=71 // pred_check
          %p529 = pneg %p52
        $region74: #{tpu_custom_call.1} parent=71 // pred_check_branch
          %531 = sbr.rel (%p529) target = $region76
        $region75: #{tpu_custom_call.1} parent=71 // pred_region
          %s532 = sand.u32 %s42, 1
          %s533 = scalar_lea.sflag [#allocation3], %s532
          %s534 = sand.u32 %s42, 1
          %s535 = smul.addr %s534, 16
          %s536 = scalar_lea.vmem [#allocation2], %s535
          %s537 = smul.u32 2, %s32
          %s539 = ssub.s32 256, 256
          %540 = vsyncadd %s533, %s539
          %s541 = smul.addr %s537, 128
          %s542 = scalar_lea.hbm %s0, %s541
          %s543 = sshll.u32 %s536, 4
          %s544 = int_to_ptr.vmem [resolvable:$true] %s543
          %549 = dma.hbm_to_vmem [thread:$0]  %s542, 256, %s544, %s533, 128, 128, 8
        $region76: #{tpu_custom_call.1} parent=71 // pred_fallthru
          _
      $region72: #{tpu_custom_call.1} parent=5 // pred_fallthru
        _
      %p550 = scmp.le.s32.totalorder 1, %s32
      %p551 = scmp.lt.s32.totalorder %s32, 3
      %p552 = pnand %p550, %p551
      %p553 = pneg %p552
      // Predicated region
      $region77: #{tpu_custom_call.1} parent=5 // pred_check
        _
      $region78: #{tpu_custom_call.1} parent=5 // pred_check_branch
        %555 = sbr.rel (%p552) target = $region80
      $region79: #{tpu_custom_call.1} parent=5 // pred_region
        %s556 = ssub.s32 %s32, 1
        %s557 = sand.u32 %s45, 1
        %s558 = scalar_lea.sflag [#allocation3], %s557
        %s559 = sand.u32 %s45, 1
        %s560 = smul.addr %s559, 16
        %s561 = scalar_lea.vmem [#allocation2], %s560
        // Predicated region
        $region81: #{tpu_custom_call.1} parent=79 // pred_check
          %p562 = pneg %p58
        $region82: #{tpu_custom_call.1} parent=79 // pred_check_branch
          %564 = sbr.rel (%p562) target = $region84
        $region83: #{tpu_custom_call.1} parent=79 // pred_region
          %565 = dma.done %s558, 256
        $region84: #{tpu_custom_call.1} parent=79 // pred_fallthru
          _
        // Predicated region
        $region85: #{tpu_custom_call.1} parent=79 // pred_check
          %p566 = pneg %p79
        $region86: #{tpu_custom_call.1} parent=79 // pred_check_branch
          %568 = sbr.rel (%p566) target = $region88
        $region87: #{tpu_custom_call.1} parent=79 // pred_region
          %569 = dma.done [#allocation6], 1024
        $region88: #{tpu_custom_call.1} parent=79 // pred_fallthru
          _
        // Predicated region
        $region89: #{tpu_custom_call.1} parent=79 // pred_check
          %p570 = pneg %p100
        $region90: #{tpu_custom_call.1} parent=79 // pred_check_branch
          %572 = sbr.rel (%p570) target = $region92
        $region91: #{tpu_custom_call.1} parent=79 // pred_region
          %573 = dma.done [#allocation6], 1024
        $region92: #{tpu_custom_call.1} parent=79 // pred_fallthru
          _
        // Predicated region
        $region93: #{tpu_custom_call.1} parent=79 // pred_check
          %p574 = pneg %p142
        $region94: #{tpu_custom_call.1} parent=79 // pred_check_branch
          %576 = sbr.rel (%p574) target = $region96
        $region95: #{tpu_custom_call.1} parent=79 // pred_region
          %577 = dma.done [#allocation9], 1024
        $region96: #{tpu_custom_call.1} parent=79 // pred_fallthru
          _
        // Predicated region
        $region97: #{tpu_custom_call.1} parent=79 // pred_check
          %p578 = pneg %p163
        $region98: #{tpu_custom_call.1} parent=79 // pred_check_branch
          %580 = sbr.rel (%p578) target = $region100
        $region99: #{tpu_custom_call.1} parent=79 // pred_region
          %581 = dma.done [#allocation9], 1024
        $region100: #{tpu_custom_call.1} parent=79 // pred_fallthru
          _
        // Predicated region
        $region101: #{tpu_custom_call.1} parent=79 // pred_check
          %p582 = pneg %p205
        $region102: #{tpu_custom_call.1} parent=79 // pred_check_branch
          %584 = sbr.rel (%p582) target = $region104
        $region103: #{tpu_custom_call.1} parent=79 // pred_region
          %585 = dma.done [#allocation12], 1024
        $region104: #{tpu_custom_call.1} parent=79 // pred_fallthru
          _
        // Predicated region
        $region105: #{tpu_custom_call.1} parent=79 // pred_check
          %p586 = pneg %p247
        $region106: #{tpu_custom_call.1} parent=79 // pred_check_branch
          %588 = sbr.rel (%p586) target = $region108
        $region107: #{tpu_custom_call.1} parent=79 // pred_region
          %589 = dma.done [#allocation12], 1024
        $region108: #{tpu_custom_call.1} parent=79 // pred_fallthru
          _
        // Predicated region
        $region109: #{tpu_custom_call.1} parent=79 // pred_check
          %p590 = pneg %p268
        $region110: #{tpu_custom_call.1} parent=79 // pred_check_branch
          %592 = sbr.rel (%p590) target = $region112
        $region111: #{tpu_custom_call.1} parent=79 // pred_region
          %593 = dma.done [#allocation15], 1024
        $region112: #{tpu_custom_call.1} parent=79 // pred_fallthru
          _
        // Predicated region
        $region113: #{tpu_custom_call.1} parent=79 // pred_check
          %p594 = pneg %p310
        $region114: #{tpu_custom_call.1} parent=79 // pred_check_branch
          %596 = sbr.rel (%p594) target = $region116
        $region115: #{tpu_custom_call.1} parent=79 // pred_region
          %597 = dma.done [#allocation15], 1024
        $region116: #{tpu_custom_call.1} parent=79 // pred_fallthru
          _
        // Predicated region
        $region117: #{tpu_custom_call.1} parent=79 // pred_check
          %p598 = pneg %p331
        $region118: #{tpu_custom_call.1} parent=79 // pred_check_branch
          %600 = sbr.rel (%p598) target = $region120
        $region119: #{tpu_custom_call.1} parent=79 // pred_region
          %601 = dma.done [#allocation18], 1024
        $region120: #{tpu_custom_call.1} parent=79 // pred_fallthru
          _
        %s602 = sand.u32 %s45, 1
        %s603 = scalar_lea.sflag [#allocation3], %s602
        %s604 = sand.u32 %s45, 1
        %s605 = smul.addr %s604, 16
        %s606 = scalar_lea.vmem [#allocation2], %s605
        %p607 = pneg %p58
        %p608 = pneg %p55
        %p609 = pneg %p79
        %p610 = pneg %p76
        %p611 = pneg %p100
        %p612 = pneg %p97
        %p613 = pneg %p121
        %p614 = pneg %p118
        %p615 = pneg %p142
        %p616 = pneg %p139
        %p617 = pneg %p163
        %p618 = pneg %p160
        %p619 = pneg %p184
        %p620 = pneg %p181
        %p621 = pneg %p205
        %p622 = pneg %p202
        %p623 = pneg %p226
        %p624 = pneg %p223
        %p625 = pneg %p247
        %p626 = pneg %p244
        %p627 = pneg %p268
        %p628 = pneg %p265
        %p629 = pneg %p289
        %p630 = pneg %p286
        %p631 = pneg %p310
        %p632 = pneg %p307
        %p633 = pneg %p331
        %p634 = pneg %p328
        %p635 = pneg %p352
        %p636 = pneg %p349
        %p637 = pneg %p378
        %p638 = pneg %p375
        %s639 = sand.u32 %s365, 1
        %s640 = scalar_lea.sflag [#allocation4], %s639
        %s641 = sand.u32 %s365, 1
        %s642 = smul.addr %s641, 16
        %s643 = scalar_lea.vmem [#allocation19], %s642
        %s644 = smul.u32 2, %s37
        %s645 = smul.u32 2, %s37
        %v647 = vld [vmem:[%s561] sm:$0xff]
        %v648 = vld [vmem:[%s561 + $0x8] sm:$0xff]
        %v649 = vlaneseq
        %v650 = vshrl.u32 %v649, 7
        %v651 = vadd.s32 %v650, 8
        %vm652 = vcmp.lt.s32.totalorder %v650, 0
        %v653 = vsub.s32 0, %v650
        %v654 = vsel %vm652, %v653, %v650
        %v655 = vshrl.u32 %v654, 4
        %v656 = vand.u32 %v654, 15
        %v657 = vsub.s32 0, %v656
        %v658 = vsel %vm652, %v657, %v656
        %vm659 = vcmp.lt.s32.totalorder %v651, 0
        %v660 = vsub.s32 0, %v651
        %v661 = vsel %vm659, %v660, %v651
        %v662 = vshrl.u32 %v661, 4
        %v663 = vand.u32 %v661, 15
        %v664 = vsub.s32 0, %v663
        %v665 = vsel %vm659, %v664, %v663
        %vm666 = vcmp.ne.s32.totalorder %v658, 0
        %vm667 = vcmp.ne.s32.totalorder %v665, 0
        %vm668 = vcmp.lt.s32.totalorder %v658, 0
        %vm669 = vcmp.lt.s32.totalorder %v665, 0
        %vm670 = vmand %vm668, %vm666
        %vm671 = vmand %vm669, %vm667
        %v672 = vadd.s32 %v658, 16
        %v673 = vadd.s32 %v665, 16
        %v674 = vsel %vm670, %v672, %v658
        %v675 = vsel %vm671, %v673, %v665
        %vm676 = vcmp.ge.s32.totalorder %v674, 1
        %vm677 = vcmp.ge.s32.totalorder %v675, 1
        %v678 = vrot.slane %v647, 7
        %v679 = vrot.slane %v648, 7
        %vm680 = vcmp.lt.s32.totalorder %v650, 1
        %v681 = vsel %vm680, %v678, %v679
        %v682 = vsel %vm680, %v679, %v678
        %v683 = vsel %vm676, 1, 0
        %v684 = vsel %vm677, 1, 0
        %vm685 = vcmp.eq.s32.totalorder %v683, 1
        %vm686 = vcmp.eq.s32.totalorder %v684, 1
        %v687 = vsel %vm685, %v682, 0.0
        %v688 = vsel %vm686, %v681, 0.0
        %v689 = vpack.c.bf16 %v648, %v647
        %v690 = vld [vmem:[#allocation5] sm:$0xf]
        %v691 = vld [vmem:[#allocation5 + $0x4] sm:$0xf]
        %v692 = vld [vmem:[#allocation5 + $0x8] sm:$0xf]
        %v693 = vld [vmem:[#allocation5 + $0xc] sm:$0xf]
        %v694 = vld [vmem:[#allocation5 + $0x10] sm:$0xf]
        %v695 = vld [vmem:[#allocation5 + $0x14] sm:$0xf]
        %v696 = vld [vmem:[#allocation5 + $0x18] sm:$0xf]
        %v697 = vld [vmem:[#allocation5 + $0x1c] sm:$0xf]
        %v698 = vld [vmem:[#allocation5 + $0x20] sm:$0xf]
        %v699 = vld [vmem:[#allocation5 + $0x24] sm:$0xf]
        %v700 = vld [vmem:[#allocation5 + $0x28] sm:$0xf]
        %v701 = vld [vmem:[#allocation5 + $0x2c] sm:$0xf]
        %v702 = vld [vmem:[#allocation5 + $0x30] sm:$0xf]
        %v703 = vld [vmem:[#allocation5 + $0x34] sm:$0xf]
        %v704 = vld [vmem:[#allocation5 + $0x38] sm:$0xf]
        %v705 = vld [vmem:[#allocation5 + $0x3c] sm:$0xf]
        %v706 = vpack.c.bf16 %v688, %v687
        %v707 = vld [vmem:[#allocation7] sm:$0xf]
        %v708 = vld [vmem:[#allocation7 + $0x4] sm:$0xf]
        %v709 = vld [vmem:[#allocation7 + $0x8] sm:$0xf]
        %v710 = vld [vmem:[#allocation7 + $0xc] sm:$0xf]
        %v711 = vld [vmem:[#allocation7 + $0x10] sm:$0xf]
        %v712 = vld [vmem:[#allocation7 + $0x14] sm:$0xf]
        %v713 = vld [vmem:[#allocation7 + $0x18] sm:$0xf]
        %v714 = vld [vmem:[#allocation7 + $0x1c] sm:$0xf]
        %v715 = vld [vmem:[#allocation7 + $0x20] sm:$0xf]
        %v716 = vld [vmem:[#allocation7 + $0x24] sm:$0xf]
        %v717 = vld [vmem:[#allocation7 + $0x28] sm:$0xf]
        %v718 = vld [vmem:[#allocation7 + $0x2c] sm:$0xf]
        %v719 = vld [vmem:[#allocation7 + $0x30] sm:$0xf]
        %v720 = vld [vmem:[#allocation7 + $0x34] sm:$0xf]
        %v721 = vld [vmem:[#allocation7 + $0x38] sm:$0xf]
        %v722 = vld [vmem:[#allocation7 + $0x3c] sm:$0xf]
        %v739 = vunpack.c.l.b16 %v707
        %v740 = vunpack.c.l.b16 %v708
        %v741 = vunpack.c.l.b16 %v709
        %v742 = vunpack.c.l.b16 %v710
        %v743 = vunpack.c.l.b16 %v711
        %v744 = vunpack.c.l.b16 %v712
        %v745 = vunpack.c.l.b16 %v713
        %v746 = vunpack.c.l.b16 %v714
        %v747 = vunpack.c.l.b16 %v715
        %v748 = vunpack.c.l.b16 %v716
        %v749 = vunpack.c.l.b16 %v717
        %v750 = vunpack.c.l.b16 %v718
        %v751 = vunpack.c.l.b16 %v719
        %v752 = vunpack.c.l.b16 %v720
        %v753 = vunpack.c.l.b16 %v721
        %v754 = vunpack.c.l.b16 %v722
        %v755 = vpack.c.b16 %v740, %v739
        %v756 = vpack.c.b16 %v742, %v741
        %v757 = vpack.c.b16 %v744, %v743
        %v758 = vpack.c.b16 %v746, %v745
        %v759 = vpack.c.b16 %v748, %v747
        %v760 = vpack.c.b16 %v750, %v749
        %v761 = vpack.c.b16 %v752, %v751
        %v762 = vpack.c.b16 %v754, %v753
        %771 = vmatprep.subr.bf16.mxu0 0
        %772 = vmatpush1.bf16.msra.mxu0 %v755
        %773 = vmatprep.subr.bf16.mxu0 0
        %774 = vmatpush1.bf16.msra.mxu0 %v756
        %775 = vmatprep.subr.bf16.mxu0 0
        %776 = vmatpush1.bf16.msra.mxu0 %v757
        %777 = vmatprep.subr.bf16.mxu0 0
        %778 = vmatpush1.bf16.msra.mxu0 %v758
        %779 = vmatprep.subr.bf16.mxu0 0
        %780 = vmatpush1.bf16.msra.mxu0 %v759
        %781 = vmatprep.subr.bf16.mxu0 0
        %782 = vmatpush1.bf16.msra.mxu0 %v760
        %783 = vmatprep.subr.bf16.mxu0 0
        %784 = vmatpush1.bf16.msra.mxu0 %v761
        %785 = vmatprep.subr.bf16.mxu0 0
        %786 = vmatpush1.bf16.msra.mxu0 %v762
        %787 = vmatprep.subr.bf16.mxu0 0
        %788 = vmatpush1.bf16.msra.mxu0 0
        %789 = vmatprep.subr.bf16.mxu0 0
        %790 = vmatpush1.bf16.msra.mxu0 0
        %791 = vmatprep.subr.bf16.mxu0 0
        %792 = vmatpush1.bf16.msra.mxu0 0
        %793 = vmatprep.subr.bf16.mxu0 0
        %794 = vmatpush1.bf16.msra.mxu0 0
        %795 = vmatprep.subr.bf16.mxu0 0
        %796 = vmatpush1.bf16.msra.mxu0 0
        %797 = vmatprep.subr.bf16.mxu0 0
        %798 = vmatpush1.bf16.msra.mxu0 0
        %799 = vmatprep.subr.bf16.mxu0 0
        %800 = vmatpush1.bf16.msra.mxu0 0
        %801 = vmatprep.subr.bf16.mxu0 0
        %802 = vmatpush1.bf16.msra.mxu0 0
        %803 = vmatprep.mubr.bf16.mxu0 0
        %804 = vmatmul.mubr.bf16.gmra.mrb[0].mxu0 %v706
        %v805 = vpop.f32.mrb[0].mxu0
        %v806 = vadd.f32 0.0, %v805
        %v807 = vpop.f32.mrb[0].mxu0
        %v808 = vpop.f32.mrb[0].mxu0
        %v809 = vadd.f32 0.0, %v808
        %v810 = vpop.f32.mrb[0].mxu0
        %811 = vdwg.mxu0
        %v828 = vunpack.c.l.b16 %v690
        %v829 = vunpack.c.l.b16 %v691
        %v830 = vunpack.c.l.b16 %v692
        %v831 = vunpack.c.l.b16 %v693
        %v832 = vunpack.c.l.b16 %v694
        %v833 = vunpack.c.l.b16 %v695
        %v834 = vunpack.c.l.b16 %v696
        %v835 = vunpack.c.l.b16 %v697
        %v836 = vunpack.c.l.b16 %v698
        %v837 = vunpack.c.l.b16 %v699
        %v838 = vunpack.c.l.b16 %v700
        %v839 = vunpack.c.l.b16 %v701
        %v840 = vunpack.c.l.b16 %v702
        %v841 = vunpack.c.l.b16 %v703
        %v842 = vunpack.c.l.b16 %v704
        %v843 = vunpack.c.l.b16 %v705
        %v844 = vpack.c.b16 %v829, %v828
        %v845 = vpack.c.b16 %v831, %v830
        %v846 = vpack.c.b16 %v833, %v832
        %v847 = vpack.c.b16 %v835, %v834
        %v848 = vpack.c.b16 %v837, %v836
        %v849 = vpack.c.b16 %v839, %v838
        %v850 = vpack.c.b16 %v841, %v840
        %v851 = vpack.c.b16 %v843, %v842
        %860 = vmatprep.subr.bf16.mxu0 0
        %861 = vmatpush1.bf16.msra.mxu0 %v844
        %862 = vmatprep.subr.bf16.mxu0 0
        %863 = vmatpush1.bf16.msra.mxu0 %v845
        %864 = vmatprep.subr.bf16.mxu0 0
        %865 = vmatpush1.bf16.msra.mxu0 %v846
        %866 = vmatprep.subr.bf16.mxu0 0
        %867 = vmatpush1.bf16.msra.mxu0 %v847
        %868 = vmatprep.subr.bf16.mxu0 0
        %869 = vmatpush1.bf16.msra.mxu0 %v848
        %870 = vmatprep.subr.bf16.mxu0 0
        %871 = vmatpush1.bf16.msra.mxu0 %v849
        %872 = vmatprep.subr.bf16.mxu0 0
        %873 = vmatpush1.bf16.msra.mxu0 %v850
        %874 = vmatprep.subr.bf16.mxu0 0
        %875 = vmatpush1.bf16.msra.mxu0 %v851
        %876 = vmatprep.subr.bf16.mxu0 0
        %877 = vmatpush1.bf16.msra.mxu0 0
        %878 = vmatprep.subr.bf16.mxu0 0
        %879 = vmatpush1.bf16.msra.mxu0 0
        %880 = vmatprep.subr.bf16.mxu0 0
        %881 = vmatpush1.bf16.msra.mxu0 0
        %882 = vmatprep.subr.bf16.mxu0 0
        %883 = vmatpush1.bf16.msra.mxu0 0
        %884 = vmatprep.subr.bf16.mxu0 0
        %885 = vmatpush1.bf16.msra.mxu0 0
        %886 = vmatprep.subr.bf16.mxu0 0
        %887 = vmatpush1.bf16.msra.mxu0 0
        %888 = vmatprep.subr.bf16.mxu0 0
        %889 = vmatpush1.bf16.msra.mxu0 0
        %890 = vmatprep.subr.bf16.mxu0 0
        %891 = vmatpush1.bf16.msra.mxu0 0
        %892 = vmatprep.mubr.bf16.mxu0 0
        %893 = vmatmul.mubr.bf16.gmra.mrb[0].mxu0 %v689
        %v894 = vpop.f32.mrb[0].mxu0
        %v895 = vadd.f32 %v806, %v894
        %v896 = vpop.f32.mrb[0].mxu0
        %v897 = vpop.f32.mrb[0].mxu0
        %v898 = vadd.f32 %v809, %v897
        %v899 = vpop.f32.mrb[0].mxu0
        %900 = vdwg.mxu0
        %v901 = vld [vmem:[%s3] sm:$0x1]
        %v903 = vlaneseq
        %v904 = vshrl.u32 %v903, 7
        %v905 = vsub.s32 0, %v904
        %v906 = vrot.slane %v901, %v905
        %v908 = vadd.f32 %v895, %v906
        %v909 = vadd.f32 %v898, %v906
        %v910 = vmax.f32 %v908, 0.0
        %v911 = vmax.f32 %v909, 0.0
        %v912 = vrot.slane %v910, 7
        %v913 = vrot.slane %v911, 7
        %v914 = vsel %vm680, %v912, %v913
        %v915 = vsel %vm680, %v913, %v912
        %v916 = vsel %vm685, %v915, 0.0
        %v917 = vsel %vm686, %v914, 0.0
        %v918 = vpack.c.bf16 %v911, %v910
        %v919 = vld [vmem:[#allocation8] sm:$0xf]
        %v920 = vld [vmem:[#allocation8 + $0x4] sm:$0xf]
        %v921 = vld [vmem:[#allocation8 + $0x8] sm:$0xf]
        %v922 = vld [vmem:[#allocation8 + $0xc] sm:$0xf]
        %v923 = vld [vmem:[#allocation8 + $0x10] sm:$0xf]
        %v924 = vld [vmem:[#allocation8 + $0x14] sm:$0xf]
        %v925 = vld [vmem:[#allocation8 + $0x18] sm:$0xf]
        %v926 = vld [vmem:[#allocation8 + $0x1c] sm:$0xf]
        %v927 = vld [vmem:[#allocation8 + $0x20] sm:$0xf]
        %v928 = vld [vmem:[#allocation8 + $0x24] sm:$0xf]
        %v929 = vld [vmem:[#allocation8 + $0x28] sm:$0xf]
        %v930 = vld [vmem:[#allocation8 + $0x2c] sm:$0xf]
        %v931 = vld [vmem:[#allocation8 + $0x30] sm:$0xf]
        %v932 = vld [vmem:[#allocation8 + $0x34] sm:$0xf]
        %v933 = vld [vmem:[#allocation8 + $0x38] sm:$0xf]
        %v934 = vld [vmem:[#allocation8 + $0x3c] sm:$0xf]
        %v935 = vpack.c.bf16 %v917, %v916
        %v936 = vld [vmem:[#allocation10] sm:$0xf]
        %v937 = vld [vmem:[#allocation10 + $0x4] sm:$0xf]
        %v938 = vld [vmem:[#allocation10 + $0x8] sm:$0xf]
        %v939 = vld [vmem:[#allocation10 + $0xc] sm:$0xf]
        %v940 = vld [vmem:[#allocation10 + $0x10] sm:$0xf]
        %v941 = vld [vmem:[#allocation10 + $0x14] sm:$0xf]
        %v942 = vld [vmem:[#allocation10 + $0x18] sm:$0xf]
        %v943 = vld [vmem:[#allocation10 + $0x1c] sm:$0xf]
        %v944 = vld [vmem:[#allocation10 + $0x20] sm:$0xf]
        %v945 = vld [vmem:[#allocation10 + $0x24] sm:$0xf]
        %v946 = vld [vmem:[#allocation10 + $0x28] sm:$0xf]
        %v947 = vld [vmem:[#allocation10 + $0x2c] sm:$0xf]
        %v948 = vld [vmem:[#allocation10 + $0x30] sm:$0xf]
        %v949 = vld [vmem:[#allocation10 + $0x34] sm:$0xf]
        %v950 = vld [vmem:[#allocation10 + $0x38] sm:$0xf]
        %v951 = vld [vmem:[#allocation10 + $0x3c] sm:$0xf]
        %v968 = vunpack.c.l.b16 %v936
        %v969 = vunpack.c.l.b16 %v937
        %v970 = vunpack.c.l.b16 %v938
        %v971 = vunpack.c.l.b16 %v939
        %v972 = vunpack.c.l.b16 %v940
        %v973 = vunpack.c.l.b16 %v941
        %v974 = vunpack.c.l.b16 %v942
        %v975 = vunpack.c.l.b16 %v943
        %v976 = vunpack.c.l.b16 %v944
        %v977 = vunpack.c.l.b16 %v945
        %v978 = vunpack.c.l.b16 %v946
        %v979 = vunpack.c.l.b16 %v947
        %v980 = vunpack.c.l.b16 %v948
        %v981 = vunpack.c.l.b16 %v949
        %v982 = vunpack.c.l.b16 %v950
        %v983 = vunpack.c.l.b16 %v951
        %v984 = vpack.c.b16 %v969, %v968
        %v985 = vpack.c.b16 %v971, %v970
        %v986 = vpack.c.b16 %v973, %v972
        %v987 = vpack.c.b16 %v975, %v974
        %v988 = vpack.c.b16 %v977, %v976
        %v989 = vpack.c.b16 %v979, %v978
        %v990 = vpack.c.b16 %v981, %v980
        %v991 = vpack.c.b16 %v983, %v982
        %1000 = vmatprep.subr.bf16.mxu0 0
        %1001 = vmatpush1.bf16.msra.mxu0 %v984
        %1002 = vmatprep.subr.bf16.mxu0 0
        %1003 = vmatpush1.bf16.msra.mxu0 %v985
        %1004 = vmatprep.subr.bf16.mxu0 0
        %1005 = vmatpush1.bf16.msra.mxu0 %v986
        %1006 = vmatprep.subr.bf16.mxu0 0
        %1007 = vmatpush1.bf16.msra.mxu0 %v987
        %1008 = vmatprep.subr.bf16.mxu0 0
        %1009 = vmatpush1.bf16.msra.mxu0 %v988
        %1010 = vmatprep.subr.bf16.mxu0 0
        %1011 = vmatpush1.bf16.msra.mxu0 %v989
        %1012 = vmatprep.subr.bf16.mxu0 0
        %1013 = vmatpush1.bf16.msra.mxu0 %v990
        %1014 = vmatprep.subr.bf16.mxu0 0
        %1015 = vmatpush1.bf16.msra.mxu0 %v991
        %1016 = vmatprep.subr.bf16.mxu0 0
        %1017 = vmatpush1.bf16.msra.mxu0 0
        %1018 = vmatprep.subr.bf16.mxu0 0
        %1019 = vmatpush1.bf16.msra.mxu0 0
        %1020 = vmatprep.subr.bf16.mxu0 0
        %1021 = vmatpush1.bf16.msra.mxu0 0
        %1022 = vmatprep.subr.bf16.mxu0 0
        %1023 = vmatpush1.bf16.msra.mxu0 0
        %1024 = vmatprep.subr.bf16.mxu0 0
        %1025 = vmatpush1.bf16.msra.mxu0 0
        %1026 = vmatprep.subr.bf16.mxu0 0
        %1027 = vmatpush1.bf16.msra.mxu0 0
        %1028 = vmatprep.subr.bf16.mxu0 0
        %1029 = vmatpush1.bf16.msra.mxu0 0
        %1030 = vmatprep.subr.bf16.mxu0 0
        %1031 = vmatpush1.bf16.msra.mxu0 0
        %1032 = vmatprep.mubr.bf16.mxu0 0
        %1033 = vmatmul.mubr.bf16.gmra.mrb[0].mxu0 %v935
        %v1034 = vpop.f32.mrb[0].mxu0
        %v1035 = vadd.f32 0.0, %v1034
        %v1036 = vpop.f32.mrb[0].mxu0
        %v1037 = vpop.f32.mrb[0].mxu0
        %v1038 = vadd.f32 0.0, %v1037
        %v1039 = vpop.f32.mrb[0].mxu0
        %1040 = vdwg.mxu0
        %v1057 = vunpack.c.l.b16 %v919
        %v1058 = vunpack.c.l.b16 %v920
        %v1059 = vunpack.c.l.b16 %v921
        %v1060 = vunpack.c.l.b16 %v922
        %v1061 = vunpack.c.l.b16 %v923
        %v1062 = vunpack.c.l.b16 %v924
        %v1063 = vunpack.c.l.b16 %v925
        %v1064 = vunpack.c.l.b16 %v926
        %v1065 = vunpack.c.l.b16 %v927
        %v1066 = vunpack.c.l.b16 %v928
        %v1067 = vunpack.c.l.b16 %v929
        %v1068 = vunpack.c.l.b16 %v930
        %v1069 = vunpack.c.l.b16 %v931
        %v1070 = vunpack.c.l.b16 %v932
        %v1071 = vunpack.c.l.b16 %v933
        %v1072 = vunpack.c.l.b16 %v934
        %v1073 = vpack.c.b16 %v1058, %v1057
        %v1074 = vpack.c.b16 %v1060, %v1059
        %v1075 = vpack.c.b16 %v1062, %v1061
        %v1076 = vpack.c.b16 %v1064, %v1063
        %v1077 = vpack.c.b16 %v1066, %v1065
        %v1078 = vpack.c.b16 %v1068, %v1067
        %v1079 = vpack.c.b16 %v1070, %v1069
        %v1080 = vpack.c.b16 %v1072, %v1071
        %1089 = vmatprep.subr.bf16.mxu0 0
        %1090 = vmatpush1.bf16.msra.mxu0 %v1073
        %1091 = vmatprep.subr.bf16.mxu0 0
        %1092 = vmatpush1.bf16.msra.mxu0 %v1074
        %1093 = vmatprep.subr.bf16.mxu0 0
        %1094 = vmatpush1.bf16.msra.mxu0 %v1075
        %1095 = vmatprep.subr.bf16.mxu0 0
        %1096 = vmatpush1.bf16.msra.mxu0 %v1076
        %1097 = vmatprep.subr.bf16.mxu0 0
        %1098 = vmatpush1.bf16.msra.mxu0 %v1077
        %1099 = vmatprep.subr.bf16.mxu0 0
        %1100 = vmatpush1.bf16.msra.mxu0 %v1078
        %1101 = vmatprep.subr.bf16.mxu0 0
        %1102 = vmatpush1.bf16.msra.mxu0 %v1079
        %1103 = vmatprep.subr.bf16.mxu0 0
        %1104 = vmatpush1.bf16.msra.mxu0 %v1080
        %1105 = vmatprep.subr.bf16.mxu0 0
        %1106 = vmatpush1.bf16.msra.mxu0 0
        %1107 = vmatprep.subr.bf16.mxu0 0
        %1108 = vmatpush1.bf16.msra.mxu0 0
        %1109 = vmatprep.subr.bf16.mxu0 0
        %1110 = vmatpush1.bf16.msra.mxu0 0
        %1111 = vmatprep.subr.bf16.mxu0 0
        %1112 = vmatpush1.bf16.msra.mxu0 0
        %1113 = vmatprep.subr.bf16.mxu0 0
        %1114 = vmatpush1.bf16.msra.mxu0 0
        %1115 = vmatprep.subr.bf16.mxu0 0
        %1116 = vmatpush1.bf16.msra.mxu0 0
        %1117 = vmatprep.subr.bf16.mxu0 0
        %1118 = vmatpush1.bf16.msra.mxu0 0
        %1119 = vmatprep.subr.bf16.mxu0 0
        %1120 = vmatpush1.bf16.msra.mxu0 0
        %1121 = vmatprep.mubr.bf16.mxu0 0
        %1122 = vmatmul.mubr.bf16.gmra.mrb[0].mxu0 %v918
        %v1123 = vpop.f32.mrb[0].mxu0
        %v1124 = vadd.f32 %v1035, %v1123
        %v1125 = vpop.f32.mrb[0].mxu0
        %v1126 = vpop.f32.mrb[0].mxu0
        %v1127 = vadd.f32 %v1038, %v1126
        %v1128 = vpop.f32.mrb[0].mxu0
        %1129 = vdwg.mxu0
        %v1130 = vld [vmem:[%s6] sm:$0x1]
        %v1132 = vlaneseq
        %v1133 = vshrl.u32 %v1132, 7
        %v1134 = vsub.s32 0, %v1133
        %v1135 = vrot.slane %v1130, %v1134
        %v1137 = vadd.f32 %v1124, %v1135
        %v1138 = vadd.f32 %v1127, %v1135
        %v1139 = vmax.f32 %v1137, 0.0
        %v1140 = vmax.f32 %v1138, 0.0
        %v1141 = vld [vmem:[#allocation11] sm:$0xf]
        %v1142 = vld [vmem:[#allocation11 + $0x4] sm:$0xf]
        %v1143 = vld [vmem:[#allocation11 + $0x8] sm:$0xf]
        %v1144 = vld [vmem:[#allocation11 + $0xc] sm:$0xf]
        %v1145 = vld [vmem:[#allocation11 + $0x10] sm:$0xf]
        %v1146 = vld [vmem:[#allocation11 + $0x14] sm:$0xf]
        %v1147 = vld [vmem:[#allocation11 + $0x18] sm:$0xf]
        %v1148 = vld [vmem:[#allocation11 + $0x1c] sm:$0xf]
        %v1149 = vld [vmem:[#allocation11 + $0x20] sm:$0xf]
        %v1150 = vld [vmem:[#allocation11 + $0x24] sm:$0xf]
        %v1151 = vld [vmem:[#allocation11 + $0x28] sm:$0xf]
        %v1152 = vld [vmem:[#allocation11 + $0x2c] sm:$0xf]
        %v1153 = vld [vmem:[#allocation11 + $0x30] sm:$0xf]
        %v1154 = vld [vmem:[#allocation11 + $0x34] sm:$0xf]
        %v1155 = vld [vmem:[#allocation11 + $0x38] sm:$0xf]
        %v1156 = vld [vmem:[#allocation11 + $0x3c] sm:$0xf]
        %v1157 = vld [vmem:[%s8] sm:$0x1]
        %v1159 = vlaneseq
        %v1160 = vshrl.u32 %v1159, 7
        %v1161 = vsub.s32 0, %v1160
        %v1162 = vrot.slane %v1157, %v1161
        %v1180 = vunpack.c.l.b16 %v1141
        %v1181 = vunpack.c.l.b16 %v1142
        %v1182 = vunpack.c.l.b16 %v1143
        %v1183 = vunpack.c.l.b16 %v1144
        %v1184 = vunpack.c.l.b16 %v1145
        %v1185 = vunpack.c.l.b16 %v1146
        %v1186 = vunpack.c.l.b16 %v1147
        %v1187 = vunpack.c.l.b16 %v1148
        %v1188 = vunpack.c.l.b16 %v1149
        %v1189 = vunpack.c.l.b16 %v1150
        %v1190 = vunpack.c.l.b16 %v1151
        %v1191 = vunpack.c.l.b16 %v1152
        %v1192 = vunpack.c.l.b16 %v1153
        %v1193 = vunpack.c.l.b16 %v1154
        %v1194 = vunpack.c.l.b16 %v1155
        %v1195 = vunpack.c.l.b16 %v1156
        %v1196 = vpack.c.b16 %v1181, %v1180
        %v1197 = vpack.c.b16 %v1183, %v1182
        %v1198 = vpack.c.b16 %v1185, %v1184
        %v1199 = vpack.c.b16 %v1187, %v1186
        %v1200 = vpack.c.b16 %v1189, %v1188
        %v1201 = vpack.c.b16 %v1191, %v1190
        %v1202 = vpack.c.b16 %v1193, %v1192
        %v1203 = vpack.c.b16 %v1195, %v1194
        %1212 = vmatprep.subr.bf16.mxu0 0
        %1213 = vmatpush1.bf16.msra.mxu0 %v1196
        %1214 = vmatprep.subr.bf16.mxu0 0
        %1215 = vmatpush1.bf16.msra.mxu0 %v1197
        %1216 = vmatprep.subr.bf16.mxu0 0
        %1217 = vmatpush1.bf16.msra.mxu0 %v1198
        %1218 = vmatprep.subr.bf16.mxu0 0
        %1219 = vmatpush1.bf16.msra.mxu0 %v1199
        %1220 = vmatprep.subr.bf16.mxu0 0
        %1221 = vmatpush1.bf16.msra.mxu0 %v1200
        %1222 = vmatprep.subr.bf16.mxu0 0
        %1223 = vmatpush1.bf16.msra.mxu0 %v1201
        %1224 = vmatprep.subr.bf16.mxu0 0
        %1225 = vmatpush1.bf16.msra.mxu0 %v1202
        %1226 = vmatprep.subr.bf16.mxu0 0
        %1227 = vmatpush1.bf16.msra.mxu0 %v1203
        %1228 = vmatprep.subr.bf16.mxu0 0
        %1229 = vmatpush1.bf16.msra.mxu0 0
        %1230 = vmatprep.subr.bf16.mxu0 0
        %1231 = vmatpush1.bf16.msra.mxu0 0
        %1232 = vmatprep.subr.bf16.mxu0 0
        %1233 = vmatpush1.bf16.msra.mxu0 0
        %1234 = vmatprep.subr.bf16.mxu0 0
        %1235 = vmatpush1.bf16.msra.mxu0 0
        %1236 = vmatprep.subr.bf16.mxu0 0
        %1237 = vmatpush1.bf16.msra.mxu0 0
        %1238 = vmatprep.subr.bf16.mxu0 0
        %1239 = vmatpush1.bf16.msra.mxu0 0
        %1240 = vmatprep.subr.bf16.mxu0 0
        %1241 = vmatpush1.bf16.msra.mxu0 0
        %1242 = vmatprep.subr.bf16.mxu0 0
        %1243 = vmatpush1.bf16.msra.mxu0 0
        %1244 = vmatprep.mubr.bf16.mxu0 0
        %1245 = vmatmul.mubr.bf16.gmra.mrb[0].mxu0 %v689
        %v1246 = vpop.f32.mrb[0].mxu0
        %v1247 = vadd.f32 %v1162, %v1246
        %v1248 = vpop.f32.mrb[0].mxu0
        %v1249 = vpop.f32.mrb[0].mxu0
        %v1250 = vadd.f32 %v1162, %v1249
        %v1251 = vpop.f32.mrb[0].mxu0
        %1252 = vdwg.mxu0
        %v1253 = vadd.f32 %v1139, %v1247
        %v1254 = vadd.f32 %v1140, %v1250
        %v1255 = vmax.f32 %v1253, 0.0
        %v1256 = vmax.f32 %v1254, 0.0
        %vm1257 = vcmp.ge.s32.totalorder %v674, 2
        %vm1258 = vcmp.ge.s32.totalorder %v675, 2
        %v1259 = vrot.slane %v1255, 6
        %v1260 = vrot.slane %v1256, 6
        %vm1261 = vcmp.lt.s32.totalorder %v650, 2
        %v1262 = vsel %vm1261, %v1259, %v1260
        %v1263 = vsel %vm1261, %v1260, %v1259
        %v1264 = vsel %vm1257, 1, 0
        %v1265 = vsel %vm1258, 1, 0
        %vm1266 = vcmp.eq.s32.totalorder %v1264, 1
        %vm1267 = vcmp.eq.s32.totalorder %v1265, 1
        %v1268 = vsel %vm1266, %v1263, 0.0
        %v1269 = vsel %vm1267, %v1262, 0.0
        %v1270 = vpack.c.bf16 %v1256, %v1255
        %v1271 = vld [vmem:[#allocation13] sm:$0xf]
        %v1272 = vld [vmem:[#allocation13 + $0x4] sm:$0xf]
        %v1273 = vld [vmem:[#allocation13 + $0x8] sm:$0xf]
        %v1274 = vld [vmem:[#allocation13 + $0xc] sm:$0xf]
        %v1275 = vld [vmem:[#allocation13 + $0x10] sm:$0xf]
        %v1276 = vld [vmem:[#allocation13 + $0x14] sm:$0xf]
        %v1277 = vld [vmem:[#allocation13 + $0x18] sm:$0xf]
        %v1278 = vld [vmem:[#allocation13 + $0x1c] sm:$0xf]
        %v1279 = vld [vmem:[#allocation13 + $0x20] sm:$0xf]
        %v1280 = vld [vmem:[#allocation13 + $0x24] sm:$0xf]
        %v1281 = vld [vmem:[#allocation13 + $0x28] sm:$0xf]
        %v1282 = vld [vmem:[#allocation13 + $0x2c] sm:$0xf]
        %v1283 = vld [vmem:[#allocation13 + $0x30] sm:$0xf]
        %v1284 = vld [vmem:[#allocation13 + $0x34] sm:$0xf]
        %v1285 = vld [vmem:[#allocation13 + $0x38] sm:$0xf]
        %v1286 = vld [vmem:[#allocation13 + $0x3c] sm:$0xf]
        %v1287 = vpack.c.bf16 %v1269, %v1268
        %v1288 = vld [vmem:[#allocation14] sm:$0xf]
        %v1289 = vld [vmem:[#allocation14 + $0x4] sm:$0xf]
        %v1290 = vld [vmem:[#allocation14 + $0x8] sm:$0xf]
        %v1291 = vld [vmem:[#allocation14 + $0xc] sm:$0xf]
        %v1292 = vld [vmem:[#allocation14 + $0x10] sm:$0xf]
        %v1293 = vld [vmem:[#allocation14 + $0x14] sm:$0xf]
        %v1294 = vld [vmem:[#allocation14 + $0x18] sm:$0xf]
        %v1295 = vld [vmem:[#allocation14 + $0x1c] sm:$0xf]
        %v1296 = vld [vmem:[#allocation14 + $0x20] sm:$0xf]
        %v1297 = vld [vmem:[#allocation14 + $0x24] sm:$0xf]
        %v1298 = vld [vmem:[#allocation14 + $0x28] sm:$0xf]
        %v1299 = vld [vmem:[#allocation14 + $0x2c] sm:$0xf]
        %v1300 = vld [vmem:[#allocation14 + $0x30] sm:$0xf]
        %v1301 = vld [vmem:[#allocation14 + $0x34] sm:$0xf]
        %v1302 = vld [vmem:[#allocation14 + $0x38] sm:$0xf]
        %v1303 = vld [vmem:[#allocation14 + $0x3c] sm:$0xf]
        %v1320 = vunpack.c.l.b16 %v1288
        %v1321 = vunpack.c.l.b16 %v1289
        %v1322 = vunpack.c.l.b16 %v1290
        %v1323 = vunpack.c.l.b16 %v1291
        %v1324 = vunpack.c.l.b16 %v1292
        %v1325 = vunpack.c.l.b16 %v1293
        %v1326 = vunpack.c.l.b16 %v1294
        %v1327 = vunpack.c.l.b16 %v1295
        %v1328 = vunpack.c.l.b16 %v1296
        %v1329 = vunpack.c.l.b16 %v1297
        %v1330 = vunpack.c.l.b16 %v1298
        %v1331 = vunpack.c.l.b16 %v1299
        %v1332 = vunpack.c.l.b16 %v1300
        %v1333 = vunpack.c.l.b16 %v1301
        %v1334 = vunpack.c.l.b16 %v1302
        %v1335 = vunpack.c.l.b16 %v1303
        %v1336 = vpack.c.b16 %v1321, %v1320
        %v1337 = vpack.c.b16 %v1323, %v1322
        %v1338 = vpack.c.b16 %v1325, %v1324
        %v1339 = vpack.c.b16 %v1327, %v1326
        %v1340 = vpack.c.b16 %v1329, %v1328
        %v1341 = vpack.c.b16 %v1331, %v1330
        %v1342 = vpack.c.b16 %v1333, %v1332
        %v1343 = vpack.c.b16 %v1335, %v1334
        %1352 = vmatprep.subr.bf16.mxu0 0
        %1353 = vmatpush1.bf16.msra.mxu0 %v1336
        %1354 = vmatprep.subr.bf16.mxu0 0
        %1355 = vmatpush1.bf16.msra.mxu0 %v1337
        %1356 = vmatprep.subr.bf16.mxu0 0
        %1357 = vmatpush1.bf16.msra.mxu0 %v1338
        %1358 = vmatprep.subr.bf16.mxu0 0
        %1359 = vmatpush1.bf16.msra.mxu0 %v1339
        %1360 = vmatprep.subr.bf16.mxu0 0
        %1361 = vmatpush1.bf16.msra.mxu0 %v1340
        %1362 = vmatprep.subr.bf16.mxu0 0
        %1363 = vmatpush1.bf16.msra.mxu0 %v1341
        %1364 = vmatprep.subr.bf16.mxu0 0
        %1365 = vmatpush1.bf16.msra.mxu0 %v1342
        %1366 = vmatprep.subr.bf16.mxu0 0
        %1367 = vmatpush1.bf16.msra.mxu0 %v1343
        %1368 = vmatprep.subr.bf16.mxu0 0
        %1369 = vmatpush1.bf16.msra.mxu0 0
        %1370 = vmatprep.subr.bf16.mxu0 0
        %1371 = vmatpush1.bf16.msra.mxu0 0
        %1372 = vmatprep.subr.bf16.mxu0 0
        %1373 = vmatpush1.bf16.msra.mxu0 0
        %1374 = vmatprep.subr.bf16.mxu0 0
        %1375 = vmatpush1.bf16.msra.mxu0 0
        %1376 = vmatprep.subr.bf16.mxu0 0
        %1377 = vmatpush1.bf16.msra.mxu0 0
        %1378 = vmatprep.subr.bf16.mxu0 0
        %1379 = vmatpush1.bf16.msra.mxu0 0
        %1380 = vmatprep.subr.bf16.mxu0 0
        %1381 = vmatpush1.bf16.msra.mxu0 0
        %1382 = vmatprep.subr.bf16.mxu0 0
        %1383 = vmatpush1.bf16.msra.mxu0 0
        %1384 = vmatprep.mubr.bf16.mxu0 0
        %1385 = vmatmul.mubr.bf16.gmra.mrb[0].mxu0 %v1287
        %v1386 = vpop.f32.mrb[0].mxu0
        %v1387 = vadd.f32 0.0, %v1386
        %v1388 = vpop.f32.mrb[0].mxu0
        %v1389 = vpop.f32.mrb[0].mxu0
        %v1390 = vadd.f32 0.0, %v1389
        %v1391 = vpop.f32.mrb[0].mxu0
        %1392 = vdwg.mxu0
        %v1409 = vunpack.c.l.b16 %v1271
        %v1410 = vunpack.c.l.b16 %v1272
        %v1411 = vunpack.c.l.b16 %v1273
        %v1412 = vunpack.c.l.b16 %v1274
        %v1413 = vunpack.c.l.b16 %v1275
        %v1414 = vunpack.c.l.b16 %v1276
        %v1415 = vunpack.c.l.b16 %v1277
        %v1416 = vunpack.c.l.b16 %v1278
        %v1417 = vunpack.c.l.b16 %v1279
        %v1418 = vunpack.c.l.b16 %v1280
        %v1419 = vunpack.c.l.b16 %v1281
        %v1420 = vunpack.c.l.b16 %v1282
        %v1421 = vunpack.c.l.b16 %v1283
        %v1422 = vunpack.c.l.b16 %v1284
        %v1423 = vunpack.c.l.b16 %v1285
        %v1424 = vunpack.c.l.b16 %v1286
        %v1425 = vpack.c.b16 %v1410, %v1409
        %v1426 = vpack.c.b16 %v1412, %v1411
        %v1427 = vpack.c.b16 %v1414, %v1413
        %v1428 = vpack.c.b16 %v1416, %v1415
        %v1429 = vpack.c.b16 %v1418, %v1417
        %v1430 = vpack.c.b16 %v1420, %v1419
        %v1431 = vpack.c.b16 %v1422, %v1421
        %v1432 = vpack.c.b16 %v1424, %v1423
        %1441 = vmatprep.subr.bf16.mxu0 0
        %1442 = vmatpush1.bf16.msra.mxu0 %v1425
        %1443 = vmatprep.subr.bf16.mxu0 0
        %1444 = vmatpush1.bf16.msra.mxu0 %v1426
        %1445 = vmatprep.subr.bf16.mxu0 0
        %1446 = vmatpush1.bf16.msra.mxu0 %v1427
        %1447 = vmatprep.subr.bf16.mxu0 0
        %1448 = vmatpush1.bf16.msra.mxu0 %v1428
        %1449 = vmatprep.subr.bf16.mxu0 0
        %1450 = vmatpush1.bf16.msra.mxu0 %v1429
        %1451 = vmatprep.subr.bf16.mxu0 0
        %1452 = vmatpush1.bf16.msra.mxu0 %v1430
        %1453 = vmatprep.subr.bf16.mxu0 0
        %1454 = vmatpush1.bf16.msra.mxu0 %v1431
        %1455 = vmatprep.subr.bf16.mxu0 0
        %1456 = vmatpush1.bf16.msra.mxu0 %v1432
        %1457 = vmatprep.subr.bf16.mxu0 0
        %1458 = vmatpush1.bf16.msra.mxu0 0
        %1459 = vmatprep.subr.bf16.mxu0 0
        %1460 = vmatpush1.bf16.msra.mxu0 0
        %1461 = vmatprep.subr.bf16.mxu0 0
        %1462 = vmatpush1.bf16.msra.mxu0 0
        %1463 = vmatprep.subr.bf16.mxu0 0
        %1464 = vmatpush1.bf16.msra.mxu0 0
        %1465 = vmatprep.subr.bf16.mxu0 0
        %1466 = vmatpush1.bf16.msra.mxu0 0
        %1467 = vmatprep.subr.bf16.mxu0 0
        %1468 = vmatpush1.bf16.msra.mxu0 0
        %1469 = vmatprep.subr.bf16.mxu0 0
        %1470 = vmatpush1.bf16.msra.mxu0 0
        %1471 = vmatprep.subr.bf16.mxu0 0
        %1472 = vmatpush1.bf16.msra.mxu0 0
        %1473 = vmatprep.mubr.bf16.mxu0 0
        %1474 = vmatmul.mubr.bf16.gmra.mrb[0].mxu0 %v1270
        %v1475 = vpop.f32.mrb[0].mxu0
        %v1476 = vadd.f32 %v1387, %v1475
        %v1477 = vpop.f32.mrb[0].mxu0
        %v1478 = vpop.f32.mrb[0].mxu0
        %v1479 = vadd.f32 %v1390, %v1478
        %v1480 = vpop.f32.mrb[0].mxu0
        %1481 = vdwg.mxu0
        %v1482 = vld [vmem:[%s11] sm:$0x1]
        %v1484 = vlaneseq
        %v1485 = vshrl.u32 %v1484, 7
        %v1486 = vsub.s32 0, %v1485
        %v1487 = vrot.slane %v1482, %v1486
        %v1489 = vadd.f32 %v1476, %v1487
        %v1490 = vadd.f32 %v1479, %v1487
        %v1491 = vmax.f32 %v1489, 0.0
        %v1492 = vmax.f32 %v1490, 0.0
        %v1493 = vrot.slane %v1491, 6
        %v1494 = vrot.slane %v1492, 6
        %v1495 = vsel %vm1261, %v1493, %v1494
        %v1496 = vsel %vm1261, %v1494, %v1493
        %v1497 = vsel %vm1266, %v1496, 0.0
        %v1498 = vsel %vm1267, %v1495, 0.0
        %v1499 = vpack.c.bf16 %v1492, %v1491
        %v1500 = vld [vmem:[#allocation16] sm:$0xf]
        %v1501 = vld [vmem:[#allocation16 + $0x4] sm:$0xf]
        %v1502 = vld [vmem:[#allocation16 + $0x8] sm:$0xf]
        %v1503 = vld [vmem:[#allocation16 + $0xc] sm:$0xf]
        %v1504 = vld [vmem:[#allocation16 + $0x10] sm:$0xf]
        %v1505 = vld [vmem:[#allocation16 + $0x14] sm:$0xf]
        %v1506 = vld [vmem:[#allocation16 + $0x18] sm:$0xf]
        %v1507 = vld [vmem:[#allocation16 + $0x1c] sm:$0xf]
        %v1508 = vld [vmem:[#allocation16 + $0x20] sm:$0xf]
        %v1509 = vld [vmem:[#allocation16 + $0x24] sm:$0xf]
        %v1510 = vld [vmem:[#allocation16 + $0x28] sm:$0xf]
        %v1511 = vld [vmem:[#allocation16 + $0x2c] sm:$0xf]
        %v1512 = vld [vmem:[#allocation16 + $0x30] sm:$0xf]
        %v1513 = vld [vmem:[#allocation16 + $0x34] sm:$0xf]
        %v1514 = vld [vmem:[#allocation16 + $0x38] sm:$0xf]
        %v1515 = vld [vmem:[#allocation16 + $0x3c] sm:$0xf]
        %v1516 = vpack.c.bf16 %v1498, %v1497
        %v1517 = vld [vmem:[#allocation17] sm:$0xf]
        %v1518 = vld [vmem:[#allocation17 + $0x4] sm:$0xf]
        %v1519 = vld [vmem:[#allocation17 + $0x8] sm:$0xf]
        %v1520 = vld [vmem:[#allocation17 + $0xc] sm:$0xf]
        %v1521 = vld [vmem:[#allocation17 + $0x10] sm:$0xf]
        %v1522 = vld [vmem:[#allocation17 + $0x14] sm:$0xf]
        %v1523 = vld [vmem:[#allocation17 + $0x18] sm:$0xf]
        %v1524 = vld [vmem:[#allocation17 + $0x1c] sm:$0xf]
        %v1525 = vld [vmem:[#allocation17 + $0x20] sm:$0xf]
        %v1526 = vld [vmem:[#allocation17 + $0x24] sm:$0xf]
        %v1527 = vld [vmem:[#allocation17 + $0x28] sm:$0xf]
        %v1528 = vld [vmem:[#allocation17 + $0x2c] sm:$0xf]
        %v1529 = vld [vmem:[#allocation17 + $0x30] sm:$0xf]
        %v1530 = vld [vmem:[#allocation17 + $0x34] sm:$0xf]
        %v1531 = vld [vmem:[#allocation17 + $0x38] sm:$0xf]
        %v1532 = vld [vmem:[#allocation17 + $0x3c] sm:$0xf]
        %v1549 = vunpack.c.l.b16 %v1517
        %v1550 = vunpack.c.l.b16 %v1518
        %v1551 = vunpack.c.l.b16 %v1519
        %v1552 = vunpack.c.l.b16 %v1520
        %v1553 = vunpack.c.l.b16 %v1521
        %v1554 = vunpack.c.l.b16 %v1522
        %v1555 = vunpack.c.l.b16 %v1523
        %v1556 = vunpack.c.l.b16 %v1524
        %v1557 = vunpack.c.l.b16 %v1525
        %v1558 = vunpack.c.l.b16 %v1526
        %v1559 = vunpack.c.l.b16 %v1527
        %v1560 = vunpack.c.l.b16 %v1528
        %v1561 = vunpack.c.l.b16 %v1529
        %v1562 = vunpack.c.l.b16 %v1530
        %v1563 = vunpack.c.l.b16 %v1531
        %v1564 = vunpack.c.l.b16 %v1532
        %v1565 = vpack.c.b16 %v1550, %v1549
        %v1566 = vpack.c.b16 %v1552, %v1551
        %v1567 = vpack.c.b16 %v1554, %v1553
        %v1568 = vpack.c.b16 %v1556, %v1555
        %v1569 = vpack.c.b16 %v1558, %v1557
        %v1570 = vpack.c.b16 %v1560, %v1559
        %v1571 = vpack.c.b16 %v1562, %v1561
        %v1572 = vpack.c.b16 %v1564, %v1563
        %1581 = vmatprep.subr.bf16.mxu0 0
        %1582 = vmatpush1.bf16.msra.mxu0 %v1565
        %1583 = vmatprep.subr.bf16.mxu0 0
        %1584 = vmatpush1.bf16.msra.mxu0 %v1566
        %1585 = vmatprep.subr.bf16.mxu0 0
        %1586 = vmatpush1.bf16.msra.mxu0 %v1567
        %1587 = vmatprep.subr.bf16.mxu0 0
        %1588 = vmatpush1.bf16.msra.mxu0 %v1568
        %1589 = vmatprep.subr.bf16.mxu0 0
        %1590 = vmatpush1.bf16.msra.mxu0 %v1569
        %1591 = vmatprep.subr.bf16.mxu0 0
        %1592 = vmatpush1.bf16.msra.mxu0 %v1570
        %1593 = vmatprep.subr.bf16.mxu0 0
        %1594 = vmatpush1.bf16.msra.mxu0 %v1571
        %1595 = vmatprep.subr.bf16.mxu0 0
        %1596 = vmatpush1.bf16.msra.mxu0 %v1572
        %1597 = vmatprep.subr.bf16.mxu0 0
        %1598 = vmatpush1.bf16.msra.mxu0 0
        %1599 = vmatprep.subr.bf16.mxu0 0
        %1600 = vmatpush1.bf16.msra.mxu0 0
        %1601 = vmatprep.subr.bf16.mxu0 0
        %1602 = vmatpush1.bf16.msra.mxu0 0
        %1603 = vmatprep.subr.bf16.mxu0 0
        %1604 = vmatpush1.bf16.msra.mxu0 0
        %1605 = vmatprep.subr.bf16.mxu0 0
        %1606 = vmatpush1.bf16.msra.mxu0 0
        %1607 = vmatprep.subr.bf16.mxu0 0
        %1608 = vmatpush1.bf16.msra.mxu0 0
        %1609 = vmatprep.subr.bf16.mxu0 0
        %1610 = vmatpush1.bf16.msra.mxu0 0
        %1611 = vmatprep.subr.bf16.mxu0 0
        %1612 = vmatpush1.bf16.msra.mxu0 0
        %1613 = vmatprep.mubr.bf16.mxu0 0
        %1614 = vmatmul.mubr.bf16.gmra.mrb[0].mxu0 %v1516
        %v1615 = vpop.f32.mrb[0].mxu0
        %v1616 = vadd.f32 0.0, %v1615
        %v1617 = vpop.f32.mrb[0].mxu0
        %v1618 = vpop.f32.mrb[0].mxu0
        %v1619 = vadd.f32 0.0, %v1618
        %v1620 = vpop.f32.mrb[0].mxu0
        %1621 = vdwg.mxu0
        %v1638 = vunpack.c.l.b16 %v1500
        %v1639 = vunpack.c.l.b16 %v1501
        %v1640 = vunpack.c.l.b16 %v1502
        %v1641 = vunpack.c.l.b16 %v1503
        %v1642 = vunpack.c.l.b16 %v1504
        %v1643 = vunpack.c.l.b16 %v1505
        %v1644 = vunpack.c.l.b16 %v1506
        %v1645 = vunpack.c.l.b16 %v1507
        %v1646 = vunpack.c.l.b16 %v1508
        %v1647 = vunpack.c.l.b16 %v1509
        %v1648 = vunpack.c.l.b16 %v1510
        %v1649 = vunpack.c.l.b16 %v1511
        %v1650 = vunpack.c.l.b16 %v1512
        %v1651 = vunpack.c.l.b16 %v1513
        %v1652 = vunpack.c.l.b16 %v1514
        %v1653 = vunpack.c.l.b16 %v1515
        %v1654 = vpack.c.b16 %v1639, %v1638
        %v1655 = vpack.c.b16 %v1641, %v1640
        %v1656 = vpack.c.b16 %v1643, %v1642
        %v1657 = vpack.c.b16 %v1645, %v1644
        %v1658 = vpack.c.b16 %v1647, %v1646
        %v1659 = vpack.c.b16 %v1649, %v1648
        %v1660 = vpack.c.b16 %v1651, %v1650
        %v1661 = vpack.c.b16 %v1653, %v1652
        %1670 = vmatprep.subr.bf16.mxu0 0
        %1671 = vmatpush1.bf16.msra.mxu0 %v1654
        %1672 = vmatprep.subr.bf16.mxu0 0
        %1673 = vmatpush1.bf16.msra.mxu0 %v1655
        %1674 = vmatprep.subr.bf16.mxu0 0
        %1675 = vmatpush1.bf16.msra.mxu0 %v1656
        %1676 = vmatprep.subr.bf16.mxu0 0
        %1677 = vmatpush1.bf16.msra.mxu0 %v1657
        %1678 = vmatprep.subr.bf16.mxu0 0
        %1679 = vmatpush1.bf16.msra.mxu0 %v1658
        %1680 = vmatprep.subr.bf16.mxu0 0
        %1681 = vmatpush1.bf16.msra.mxu0 %v1659
        %1682 = vmatprep.subr.bf16.mxu0 0
        %1683 = vmatpush1.bf16.msra.mxu0 %v1660
        %1684 = vmatprep.subr.bf16.mxu0 0
        %1685 = vmatpush1.bf16.msra.mxu0 %v1661
        %1686 = vmatprep.subr.bf16.mxu0 0
        %1687 = vmatpush1.bf16.msra.mxu0 0
        %1688 = vmatprep.subr.bf16.mxu0 0
        %1689 = vmatpush1.bf16.msra.mxu0 0
        %1690 = vmatprep.subr.bf16.mxu0 0
        %1691 = vmatpush1.bf16.msra.mxu0 0
        %1692 = vmatprep.subr.bf16.mxu0 0
        %1693 = vmatpush1.bf16.msra.mxu0 0
        %1694 = vmatprep.subr.bf16.mxu0 0
        %1695 = vmatpush1.bf16.msra.mxu0 0
        %1696 = vmatprep.subr.bf16.mxu0 0
        %1697 = vmatpush1.bf16.msra.mxu0 0
        %1698 = vmatprep.subr.bf16.mxu0 0
        %1699 = vmatpush1.bf16.msra.mxu0 0
        %1700 = vmatprep.subr.bf16.mxu0 0
        %1701 = vmatpush1.bf16.msra.mxu0 0
        %1702 = vmatprep.mubr.bf16.mxu0 0
        %1703 = vmatmul.mubr.bf16.gmra.mrb[0].mxu0 %v1499
        %v1704 = vpop.f32.mrb[0].mxu0
        %v1705 = vadd.f32 %v1616, %v1704
        %v1706 = vpop.f32.mrb[0].mxu0
        %v1707 = vpop.f32.mrb[0].mxu0
        %v1708 = vadd.f32 %v1619, %v1707
        %v1709 = vpop.f32.mrb[0].mxu0
        %1710 = vdwg.mxu0
        %v1711 = vld [vmem:[%s14] sm:$0x1]
        %v1713 = vlaneseq
        %v1714 = vshrl.u32 %v1713, 7
        %v1715 = vsub.s32 0, %v1714
        %v1716 = vrot.slane %v1711, %v1715
        %v1718 = vadd.f32 %v1705, %v1716
        %v1719 = vadd.f32 %v1708, %v1716
        %v1720 = vmax.f32 %v1718, 0.0
        %v1721 = vmax.f32 %v1719, 0.0
        %v1722 = vadd.f32 %v1720, %v1255
        %v1723 = vadd.f32 %v1721, %v1256
        %v1724 = vmax.f32 %v1722, 0.0
        %v1725 = vmax.f32 %v1723, 0.0
        %1726 = vst [vmem:[%s643] sm:$0xff] %v1724
        %1727 = vst [vmem:[%s643 + $0x8] sm:$0xff] %v1725
        %s1728 = sand.u32 %s365, 1
        %s1729 = scalar_lea.sflag [#allocation4], %s1728
        %s1730 = sand.u32 %s365, 1
        %s1731 = smul.addr %s1730, 16
        %s1732 = scalar_lea.vmem [#allocation19], %s1731
        // Predicated region
        $region121: #{tpu_custom_call.1} parent=79 // pred_check
          %p1733 = pneg %p375
        $region122: #{tpu_custom_call.1} parent=79 // pred_check_branch
          %1735 = sbr.rel (%p1733) target = $region124
        $region123: #{tpu_custom_call.1} parent=79 // pred_region
          %s1736 = smul.u32 2, %s37
          %s1738 = ssub.s32 256, 256
          %1739 = vsyncadd %s1729, %s1738
          %s1740 = smul.addr %s1736, 128
          %s1741 = scalar_lea.hbm %s15, %s1740
          %s1742 = sshll.u32 %s1732, 4
          %s1743 = int_to_ptr.vmem [resolvable:$true] %s1742
          %1748 = dma.vmem_to_hbm [thread:$0]  %s1743, 256, %s1741, %s1729, 128, 128, 8
        $region124: #{tpu_custom_call.1} parent=79 // pred_fallthru
          _
      $region80: #{tpu_custom_call.1} parent=5 // pred_fallthru
        _
      %p1749 = scmp.le.s32.totalorder 2, %s32
      // Predicated region
      $region125: #{tpu_custom_call.1} parent=5 // pred_check
        %p1750 = pneg %p1749
      $region126: #{tpu_custom_call.1} parent=5 // pred_check_branch
        %1752 = sbr.rel (%p1750) target = $region128
      $region127: #{tpu_custom_call.1} parent=5 // pred_region
        %s1753 = ssub.s32 %s32, 2
        // Predicated region
        $region129: #{tpu_custom_call.1} parent=127 // pred_check
          %p1754 = pneg %p381
        $region130: #{tpu_custom_call.1} parent=127 // pred_check_branch
          %1756 = sbr.rel (%p1754) target = $region132
        $region131: #{tpu_custom_call.1} parent=127 // pred_region
          %s1757 = sand.u32 %s366, 1
          %s1758 = scalar_lea.sflag [#allocation4], %s1757
          %s1759 = sand.u32 %s366, 1
          %s1760 = smul.addr %s1759, 16
          %s1761 = scalar_lea.vmem [#allocation19], %s1760
          %1762 = dma.done %s1758, 256
        $region132: #{tpu_custom_call.1} parent=127 // pred_fallthru
          _
      $region128: #{tpu_custom_call.1} parent=5 // pred_fallthru
        _
    $region6: #{tpu_custom_call.1} parent=1 // loop_footer
      %s36 = sadd.s32 1, %s32
    $region7: #{tpu_custom_call.1} parent=1 // loop_footer_branch
      %31 = sbr.rel target = $region3
    $region8: #{tpu_custom_call.1} parent=1 // loop_exit
      _
    %1763 = vsyncpa [#allocation3], 1
    %s1764 = scalar_lea.sflag [#allocation3], 1
    %1765 = vsyncpa %s1764, 1
    %1766 = vsyncpa [#allocation6], 1
    %1767 = vsyncpa [#allocation9], 1
    %1768 = vsyncpa [#allocation12], 1
    %1769 = vsyncpa [#allocation15], 1
    %1770 = vsyncpa [#allocation18], 1
    %1771 = vsyncpa [#allocation4], 1
    %s1772 = scalar_lea.sflag [#allocation4], 1
    %1773 = vsyncpa %s1772, 1

</llo_original>
